<compile_context>
chip_gen: v5e
topology: v5e:2x2
jax: 0.10.0
libtpu: 0.0.40
codegen_flags: <defaults>
</compile_context>

<pallas_src>
import math

import jax
import jax.numpy as jnp
from jax.experimental import pallas as pl
from jax.experimental.pallas import tpu as pltpu

_INV_SQRT2 = 1.0 / math.sqrt(2.0)
_NEG_INF = -1e30   # finite sentinel: keeps the online softmax NaN-free


def _layernorm(h, w, b, eps=1e-5):
    mu = jnp.mean(h, axis=-1, keepdims=True)
    var = jnp.mean((h - mu) * (h - mu), axis=-1, keepdims=True)
    return (h - mu) * jax.lax.rsqrt(var + eps) * w + b


# --------------------------------------------------------------------------------------
# Stage 1: LN1 + fused QKV projection, row-tiled over (B, T//TR).
# Outputs q/k/v directly in (B, H, T, hd) bf16; q is pre-scaled by 1/sqrt(hd).
# --------------------------------------------------------------------------------------
def _qkv_kernel(x_ref, ln1w_ref, ln1b_ref, wqkv_ref, bqkv_ref, q_ref, k_ref, v_ref):
    x = x_ref[...].astype(jnp.float32)                         # (TR, C)
    C = x.shape[-1]
    H, _, hd = q_ref.shape                                     # (H, TR, hd)

    h = _layernorm(x, ln1w_ref[0], ln1b_ref[0])
    qkv = jnp.dot(h.astype(jnp.bfloat16), wqkv_ref[...],       # bf16 x bf16 -> f32 acc
                  preferred_element_type=jnp.float32) + bqkv_ref[0]   # (TR, 3C)

    q = qkv[:, :C] * (1.0 / math.sqrt(hd))    # fold softmax scale into q (f32, pre-cast)
    k = qkv[:, C:2 * C]
    v = qkv[:, 2 * C:]
    # Head split done as static lane-slice copies (layout plumbing hidden under the MXU).
    for hi in range(H):
        sl = slice(hi * hd, (hi + 1) * hd)
        q_ref[hi] = q[:, sl].astype(q_ref.dtype)
        k_ref[hi] = k[:, sl].astype(k_ref.dtype)
        v_ref[hi] = v[:, sl].astype(v_ref.dtype)


# --------------------------------------------------------------------------------------
# Stage 2: flash (KV-tiled online-softmax) causal attention + output proj + residual.
# Grid (B, T//TQ, T//TK); kv axis innermost "arbitrary"; m/l/acc live in VMEM scratch.
# --------------------------------------------------------------------------------------
def _attn_kernel(x_ref, q_ref, k_ref, v_ref, wproj_ref, bproj_ref, o_ref,
                 m_sc, l_sc, acc_sc, ym_sc):
    qi = pl.program_id(1)
    ki = pl.program_id(2)
    nk = pl.num_programs(2)
    H, TQ, hd = q_ref.shape
    TK = k_ref.shape[1]

    @pl.when(ki == 0)
    def _():
        m_sc[...] = jnp.full(m_sc.shape, _NEG_INF, jnp.float32)
        l_sc[...] = jnp.zeros(l_sc.shape, jnp.float32)
        acc_sc[...] = jnp.zeros(acc_sc.shape, jnp.float32)

    # Causal tile skip: this KV tile contributes only if its first key <= last query row.
    @pl.when(ki * TK <= qi * TQ + (TQ - 1))
    def _():
        s = jnp.einsum("hqd,hkd->hqk", q_ref[...], k_ref[...],
                       preferred_element_type=jnp.float32)            # (H, TQ, TK)
        row = qi * TQ + jax.lax.broadcasted_iota(jnp.int32, (TQ, TK), 0)
        col = ki * TK + jax.lax.broadcasted_iota(jnp.int32, (TQ, TK), 1)
        s = jnp.where((row >= col)[None], s, _NEG_INF)                 # 2D mask, bcast over H

        m_prev = m_sc[...]
        m_new = jnp.maximum(m_prev, jnp.max(s, axis=-1, keepdims=True))
        alpha = jnp.exp(m_prev - m_new)
        p = jnp.exp(s - m_new)
        l_sc[...] = alpha * l_sc[...] + jnp.sum(p, axis=-1, keepdims=True)
        acc_sc[...] = alpha * acc_sc[...] + jnp.einsum(
            "hqk,hkd->hqd", p.astype(jnp.bfloat16), v_ref[...],
            preferred_element_type=jnp.float32)
        m_sc[...] = m_new

    @pl.when(ki == nk - 1)
    def _():
        inv_l = pl.reciprocal(l_sc[...], approx=True)                  # (H, TQ, 1), EUP
        # Head merge as static lane-slice stores into a (TQ, C) bf16 scratch, then a
        # single K=C output-projection matmul (full MXU depth).
        for hi in range(H):
            ym_sc[:, hi * hd:(hi + 1) * hd] = (acc_sc[hi] * inv_l[hi]).astype(ym_sc.dtype)
        y = jnp.dot(ym_sc[...], wproj_ref[...],
                    preferred_element_type=jnp.float32) + bproj_ref[0]
        o_ref[...] = (x_ref[...].astype(jnp.float32) + y).astype(o_ref.dtype)


# --------------------------------------------------------------------------------------
# Stage 3: LN2 + MLP (GELU) + residual; FFN hidden dim streamed over grid axis 2.
# --------------------------------------------------------------------------------------
def _mlp_kernel(x1_ref, ln2w_ref, ln2b_ref, wfc_ref, bfc_ref, wmlp_ref, bmlp_ref,
                o_ref, hnorm_sc, acc_sc):
    hi = pl.program_id(2)
    nh = pl.num_programs(2)

    @pl.when(hi == 0)
    def _():
        x1 = x1_ref[...].astype(jnp.float32)                            # (TR, C)
        hn = _layernorm(x1, ln2w_ref[0], ln2b_ref[0])
        hnorm_sc[...] = hn.astype(hnorm_sc.dtype)
        acc_sc[...] = x1 + bmlp_ref[0]            # residual + final-projection bias

    part = jnp.dot(hnorm_sc[...], wfc_ref[...],                         # (TR, Hc)
                   preferred_element_type=jnp.float32) + bfc_ref[0]
    part = 0.5 * part * (1.0 + jax.lax.erf(part * _INV_SQRT2))          # exact GELU
    acc_sc[...] = acc_sc[...] + jnp.dot(part.astype(jnp.bfloat16), wmlp_ref[...],
                                        preferred_element_type=jnp.float32)

    @pl.when(hi == nh - 1)
    def _():
        o_ref[...] = acc_sc[...].astype(o_ref.dtype)


# --------------------------------------------------------------------------------------
# Wrapper
# --------------------------------------------------------------------------------------
def block_forward(x, params, n_head, *,
                  row_block=None, q_block=None, kv_block=None, hidden_block=None,
                  vmem_limit_bytes=48 * 1024 * 1024,
                  single_buffer_weights=True):
    """x: (B, T, C) f32.  params: dict of f32 arrays, weights pre-transposed to (in, out)."""
    B, T, C = x.shape
    assert C % n_head == 0
    H = n_head
    hd = C // H

    TR = row_block if row_block is not None else min(128, T)       # stage-1/3 row tile
    TQ = q_block if q_block is not None else min(128, T)           # query tile
    TK = kv_block if kv_block is not None else min(256, T)         # key/value tile
    HC = hidden_block if hidden_block is not None else min(512, 4 * C)  # FFN hidden chunk
    assert T % TR == 0 and T % TQ == 0 and T % TK == 0 and (4 * C) % HC == 0

    bf16 = jnp.bfloat16
    ln1_w, ln1_b = params["ln1_w"], params["ln1_b"]
    ln2_w, ln2_b = params["ln2_w"], params["ln2_b"]
    w_qkv = params["w_qkv"].astype(bf16)                            # (C, 3C)
    b_qkv = params["b_qkv"]                                         # (1, 3C)
    w_proj = params["w_attn_proj"].astype(bf16)                     # (C, C)
    b_proj = params["b_attn_proj"]
    w_fc = params["w_fc"].astype(bf16)                              # (C, 4C)
    b_fc = params["b_fc"]
    w_mlp = params["w_mlp_proj"].astype(bf16)                       # (4C, C)
    b_mlp = params["b_mlp_proj"]

    def const_spec(shape):
        idx = lambda *_: (0,) * len(shape)
        if single_buffer_weights:
            # Constant index map: the second pipeline buffer is pure waste.
            return pl.BlockSpec(shape, idx, pipeline_mode=pl.Buffered(1))
        return pl.BlockSpec(shape, idx)

    cp2 = pltpu.CompilerParams(dimension_semantics=("parallel", "parallel"),
                               vmem_limit_bytes=vmem_limit_bytes)
    cp3 = pltpu.CompilerParams(dimension_semantics=("parallel", "parallel", "arbitrary"),
                               vmem_limit_bytes=vmem_limit_bytes)

    # ---- stage 1: LN1 + QKV, emit head-split (B, H, T, hd) bf16 ----
    x_row_spec = pl.BlockSpec((pl.Squeezed(), TR, C), lambda b, r: (b, r, 0))
    head_out_spec = pl.BlockSpec((pl.Squeezed(), H, TR, hd), lambda b, r: (b, 0, r, 0))

    q, k, v = pl.pallas_call(
        _qkv_kernel,
        out_shape=tuple(jax.ShapeDtypeStruct((B, H, T, hd), bf16) for _ in range(3)),
        grid_spec=pltpu.PrefetchScalarGridSpec(
            num_scalar_prefetch=0,
            grid=(B, T // TR),
            in_specs=[x_row_spec,
                      const_spec((1, C)), const_spec((1, C)),
                      const_spec((C, 3 * C)), const_spec((1, 3 * C))],
            out_specs=[head_out_spec, head_out_spec, head_out_spec],
        ),
        compiler_params=cp2,
    )(x, ln1_w, ln1_b, w_qkv, b_qkv)

    # ---- stage 2: flash causal attention + output projection + residual ----
    x_q_spec = pl.BlockSpec((pl.Squeezed(), TQ, C), lambda b, qi, ki: (b, qi, 0))
    q_spec = pl.BlockSpec((pl.Squeezed(), H, TQ, hd), lambda b, qi, ki: (b, 0, qi, 0))
    kv_spec = pl.BlockSpec((pl.Squeezed(), H, TK, hd), lambda b, qi, ki: (b, 0, ki, 0))

    x1 = pl.pallas_call(
        _attn_kernel,
        out_shape=jax.ShapeDtypeStruct((B, T, C), jnp.float32),
        grid_spec=pltpu.PrefetchScalarGridSpec(
            num_scalar_prefetch=0,
            grid=(B, T // TQ, T // TK),
            in_specs=[x_q_spec, q_spec, kv_spec, kv_spec,
                      const_spec((C, C)), const_spec((1, C))],
            out_specs=x_q_spec,
            scratch_shapes=[pltpu.VMEM((H, TQ, 1), jnp.float32),   # running max
                            pltpu.VMEM((H, TQ, 1), jnp.float32),   # running sum
                            pltpu.VMEM((H, TQ, hd), jnp.float32),  # accumulator
                            pltpu.VMEM((TQ, C), bf16)],            # merged-head buffer
        ),
        compiler_params=cp3,
    )(x, q, k, v, w_proj, b_proj)

    # ---- stage 3: LN2 + MLP (hidden dim streamed) + residual ----
    x_r_spec = pl.BlockSpec((pl.Squeezed(), TR, C), lambda b, r, h: (b, r, 0))

    out = pl.pallas_call(
        _mlp_kernel,
        out_shape=jax.ShapeDtypeStruct((B, T, C), jnp.float32),
        grid_spec=pltpu.PrefetchScalarGridSpec(
            num_scalar_prefetch=0,
            grid=(B, T // TR, (4 * C) // HC),
            in_specs=[x_r_spec,
                      const_spec((1, C)), const_spec((1, C)),
                      pl.BlockSpec((C, HC), lambda b, r, h: (0, h)),   # wfc chunk
                      pl.BlockSpec((1, HC), lambda b, r, h: (0, h)),   # bfc chunk
                      pl.BlockSpec((HC, C), lambda b, r, h: (h, 0)),   # wmlp chunk
                      const_spec((1, C))],
            out_specs=x_r_spec,
            scratch_shapes=[pltpu.VMEM((TR, C), bf16),                 # LN2 output
                            pltpu.VMEM((TR, C), jnp.float32)],         # MLP accumulator
        ),
        compiler_params=cp3,
    )(x1, ln2_w, ln2_b, w_fc, b_fc, w_mlp, b_mlp)
    return out


# --------------------------------------------------------------------------------------
# Params + pure-JAX reference (mirrors the kernel's bf16-operand / f32-accum matmuls)
# --------------------------------------------------------------------------------------
def _init_params(key, C):
    ks = jax.random.split(key, 12)
    scale = 0.02
    w_qkv = jax.random.normal(ks[0], (3 * C, C), jnp.float32) * scale
    b_qkv = jax.random.normal(ks[1], (3 * C,), jnp.float32) * scale
    w_ap = jax.random.normal(ks[2], (C, C), jnp.float32) * scale
    b_ap = jax.random.normal(ks[3], (C,), jnp.float32) * scale
    w_fc = jax.random.normal(ks[4], (4 * C, C), jnp.float32) * scale
    b_fc = jax.random.normal(ks[5], (4 * C,), jnp.float32) * scale
    w_mp = jax.random.normal(ks[6], (C, 4 * C), jnp.float32) * scale
    b_mp = jax.random.normal(ks[7], (C,), jnp.float32) * scale
    return {
        "ln1_w": 1.0 + 0.1 * jax.random.normal(ks[8], (1, C), jnp.float32),
        "ln1_b": 0.1 * jax.random.normal(ks[9], (1, C), jnp.float32),
        "w_qkv": w_qkv.T, "b_qkv": b_qkv.reshape(1, -1),
        "w_attn_proj": w_ap.T, "b_attn_proj": b_ap.reshape(1, -1),
        "ln2_w": 1.0 + 0.1 * jax.random.normal(ks[10], (1, C), jnp.float32),
        "ln2_b": 0.1 * jax.random.normal(ks[11], (1, C), jnp.float32),
        "w_fc": w_fc.T, "b_fc": b_fc.reshape(1, -1),
        "w_mlp_proj": w_mp.T, "b_mlp_proj": b_mp.reshape(1, -1),
    }


def _reference(x, p, n_head):
    f32, bf16 = jnp.float32, jnp.bfloat16
    B, T, C = x.shape
    hd = C // n_head

    def ln(h, w, b):
        mu = jnp.mean(h, axis=-1, keepdims=True)
        var = jnp.mean((h - mu) ** 2, axis=-1, keepdims=True)
        return (h - mu) * jax.lax.rsqrt(var + 1e-5) * w[0] + b[0]

    def mm(a, w):  # bf16 operands, f32 accumulation (matches the kernels)
        return jnp.dot(a.astype(bf16), w.astype(bf16), preferred_element_type=f32)

    h = ln(x, p["ln1_w"], p["ln1_b"])
    qkv = mm(h, p["w_qkv"]) + p["b_qkv"][0]
    q = qkv[..., :C] * (1.0 / math.sqrt(hd))        # scale folded into q, as in the kernel
    k, v = qkv[..., C:2 * C], qkv[..., 2 * C:]

    def heads(t):
        return t.reshape(B, T, n_head, hd).transpose(0, 2, 1, 3).astype(bf16)

    q, k, v = heads(q), heads(k), heads(v)
    att = jnp.einsum("bhqd,bhkd->bhqk", q, k, preferred_element_type=f32)
    mask = jnp.tril(jnp.ones((T, T), bool))
    att = jnp.where(mask, att, _NEG_INF)
    att = att - jnp.max(att, axis=-1, keepdims=True)
    pr = jnp.exp(att)
    pr = pr / jnp.sum(pr, axis=-1, keepdims=True)
    y = jnp.einsum("bhqk,bhkd->bhqd", pr.astype(bf16), v, preferred_element_type=f32)
    y = y.transpose(0, 2, 1, 3).reshape(B, T, C)     # merge heads (h major, d minor)
    y = mm(y, p["w_attn_proj"]) + p["b_attn_proj"][0]
    x1 = x + y

    h2 = ln(x1, p["ln2_w"], p["ln2_b"])
    h2 = mm(h2, p["w_fc"]) + p["b_fc"][0]
    h2 = 0.5 * h2 * (1.0 + jax.lax.erf(h2 * _INV_SQRT2))
    h2 = mm(h2, p["w_mlp_proj"]) + p["b_mlp_proj"][0]
    return x1 + h2


if __name__ == "__main__":
    # Small GPT config: n_embd=64, n_head=4 (hd=16), seq=32.
    # Tiles chosen so every kernel exercises >1 tile along each tiled axis:
    # 2 row tiles, 2 query tiles, 2 KV tiles (causal skip hit), 2 FFN hidden chunks.
    B, T, C, N_HEAD = 2, 32, 64, 4
    key = jax.random.PRNGKey(0)
    kx, kp = jax.random.split(key)
    x = jax.random.normal(kx, (B, T, C), jnp.float32)
    params = _init_params(kp, C)

    tile_kwargs = dict(row_block=16, q_block=16, kv_block=16, hidden_block=128)
    try:
        out = jax.block_until_ready(block_forward(x, params, N_HEAD, **tile_kwargs))
    except Exception:
        # pl.Buffered(1) (single-buffered constant weights) is a recent pipeline knob;
        # fall back to default double-buffering if this JAX/Mosaic build rejects it.
        out = jax.block_until_ready(
            block_forward(x, params, N_HEAD, single_buffer_weights=False, **tile_kwargs))

    ref = _reference(x, params, N_HEAD)
    assert out.shape == (B, T, C)
    max_err = float(jnp.max(jnp.abs(out - ref)))
    assert jnp.allclose(out, ref, atol=2e-3, rtol=2e-3), \
        f"mismatch vs reference (max abs err {max_err})"
    print("KERNEL_OK")
</pallas_src>

<mosaic_0001>
module attributes {stable_mosaic.version = 11 : i64} {
  func.func @_qkv_kernel(%arg0: i32, %arg1: i32, %arg2: memref<1x16x64xf32, #tpu.memory_space<vmem>>, %arg3: memref<1x64xf32, #tpu.memory_space<vmem>>, %arg4: memref<1x64xf32, #tpu.memory_space<vmem>>, %arg5: memref<64x192xbf16, #tpu.memory_space<vmem>>, %arg6: memref<1x192xf32, #tpu.memory_space<vmem>>, %arg7: memref<1x4x16x16xbf16, #tpu.memory_space<vmem>>, %arg8: memref<1x4x16x16xbf16, #tpu.memory_space<vmem>>, %arg9: memref<1x4x16x16xbf16, #tpu.memory_space<vmem>>) attributes {dimension_semantics = [#tpu.dimension_semantics<parallel>, #tpu.dimension_semantics<parallel>], iteration_bounds = array<i64: 2, 2>, scalar_prefetch = 0 : i64, scratch_operands = 0 : i64, tpu.core_type = #tpu.core_type<tc>, window_params = [{transform_indices = @transform_0, window_bounds = array<i64: 1, 16, 64>}, {pipeline_mode = #tpu.pipeline_mode<synchronous>, transform_indices = @transform_1, window_bounds = array<i64: 1, 64>}, {pipeline_mode = #tpu.pipeline_mode<synchronous>, transform_indices = @transform_2, window_bounds = array<i64: 1, 64>}, {pipeline_mode = #tpu.pipeline_mode<synchronous>, transform_indices = @transform_3, window_bounds = array<i64: 64, 192>}, {pipeline_mode = #tpu.pipeline_mode<synchronous>, transform_indices = @transform_4, window_bounds = array<i64: 1, 192>}, {transform_indices = @transform_5, window_bounds = array<i64: 1, 4, 16, 16>}, {transform_indices = @transform_6, window_bounds = array<i64: 1, 4, 16, 16>}, {transform_indices = @transform_7, window_bounds = array<i64: 1, 4, 16, 16>}]} {
    %c0 = arith.constant 0 : index
    %c0_0 = arith.constant 0 : index
    %c0_1 = arith.constant 0 : index
    %0 = vector.load %arg2[%c0, %c0_0, %c0_1] : memref<1x16x64xf32, #tpu.memory_space<vmem>>, vector<1x16x64xf32>
    %1 = vector.shape_cast %0 : vector<1x16x64xf32> to vector<16x64xf32>
    %c0_2 = arith.constant 0 : index
    %c0_3 = arith.constant 0 : index
    %2 = vector.load %arg3[%c0_2, %c0_3] : memref<1x64xf32, #tpu.memory_space<vmem>>, vector<1x64xf32>
    %3 = vector.shape_cast %2 : vector<1x64xf32> to vector<64xf32>
    %c0_4 = arith.constant 0 : index
    %c0_5 = arith.constant 0 : index
    %4 = vector.load %arg4[%c0_4, %c0_5] : memref<1x64xf32, #tpu.memory_space<vmem>>, vector<1x64xf32>
    %5 = vector.shape_cast %4 : vector<1x64xf32> to vector<64xf32>
    %cst = arith.constant dense<0.000000e+00> : vector<16xf32>
    %6 = vector.multi_reduction <add>, %1, %cst [1] : vector<16x64xf32> to vector<16xf32>
    %7 = vector.shape_cast %6 : vector<16xf32> to vector<16x1xf32>
    %cst_6 = arith.constant 6.400000e+01 : f32
    %8 = vector.broadcast %cst_6 : f32 to vector<16x1xf32>
    %9 = arith.divf %7, %8 : vector<16x1xf32>
    %10 = vector.broadcast %9 : vector<16x1xf32> to vector<16x64xf32>
    %11 = arith.subf %1, %10 : vector<16x64xf32>
    %12 = vector.broadcast %9 : vector<16x1xf32> to vector<16x64xf32>
    %13 = arith.subf %1, %12 : vector<16x64xf32>
    %14 = arith.mulf %11, %13 : vector<16x64xf32>
    %cst_7 = arith.constant dense<0.000000e+00> : vector<16xf32>
    %15 = vector.multi_reduction <add>, %14, %cst_7 [1] : vector<16x64xf32> to vector<16xf32>
    %16 = vector.shape_cast %15 : vector<16xf32> to vector<16x1xf32>
    %cst_8 = arith.constant 6.400000e+01 : f32
    %17 = vector.broadcast %cst_8 : f32 to vector<16x1xf32>
    %18 = arith.divf %16, %17 : vector<16x1xf32>
    %19 = vector.broadcast %9 : vector<16x1xf32> to vector<16x64xf32>
    %20 = arith.subf %1, %19 : vector<16x64xf32>
    %cst_9 = arith.constant 9.99999974E-6 : f32
    %21 = vector.broadcast %cst_9 : f32 to vector<16x1xf32>
    %22 = arith.addf %18, %21 : vector<16x1xf32>
    %23 = math.rsqrt %22 : vector<16x1xf32>
    %24 = vector.broadcast %23 : vector<16x1xf32> to vector<16x64xf32>
    %25 = arith.mulf %20, %24 : vector<16x64xf32>
    %26 = vector.shape_cast %3 : vector<64xf32> to vector<1x64xf32>
    %27 = vector.broadcast %26 : vector<1x64xf32> to vector<16x64xf32>
    %28 = arith.mulf %25, %27 : vector<16x64xf32>
    %29 = vector.shape_cast %5 : vector<64xf32> to vector<1x64xf32>
    %30 = vector.broadcast %29 : vector<1x64xf32> to vector<16x64xf32>
    %31 = arith.addf %28, %30 : vector<16x64xf32>
    %32 = arith.truncf %31 : vector<16x64xf32> to vector<16x64xbf16>
    %c0_10 = arith.constant 0 : index
    %c0_11 = arith.constant 0 : index
    %33 = vector.load %arg5[%c0_10, %c0_11] : memref<64x192xbf16, #tpu.memory_space<vmem>>, vector<64x192xbf16>
    %cst_12 = arith.constant dense<0.000000e+00> : vector<16x192xf32>
    %34 = tpu.matmul %32, %33, %cst_12 {dimension_numbers = #tpu.dot_dimension_numbers<[1], [0], [0], [1], [0, 0, 1, 1], [], []>} : vector<16x64xbf16>, vector<64x192xbf16>, vector<16x192xf32> -> vector<16x192xf32>
    %c0_13 = arith.constant 0 : index
    %c0_14 = arith.constant 0 : index
    %35 = vector.load %arg6[%c0_13, %c0_14] : memref<1x192xf32, #tpu.memory_space<vmem>>, vector<1x192xf32>
    %36 = vector.shape_cast %35 : vector<1x192xf32> to vector<192xf32>
    %37 = vector.shape_cast %36 : vector<192xf32> to vector<1x192xf32>
    %38 = vector.broadcast %37 : vector<1x192xf32> to vector<16x192xf32>
    %39 = arith.addf %34, %38 : vector<16x192xf32>
    %40 = vector.extract_strided_slice %39 {offsets = [0, 0], sizes = [16, 64], strides = [1, 1]} : vector<16x192xf32> to vector<16x64xf32>
    %cst_15 = arith.constant 2.500000e-01 : f32
    %41 = vector.broadcast %cst_15 : f32 to vector<16x64xf32>
    %42 = arith.mulf %40, %41 : vector<16x64xf32>
    %43 = vector.extract_strided_slice %39 {offsets = [0, 64], sizes = [16, 64], strides = [1, 1]} : vector<16x192xf32> to vector<16x64xf32>
    %44 = vector.extract_strided_slice %39 {offsets = [0, 128], sizes = [16, 64], strides = [1, 1]} : vector<16x192xf32> to vector<16x64xf32>
    %45 = vector.extract_strided_slice %42 {offsets = [0, 0], sizes = [16, 16], strides = [1, 1]} : vector<16x64xf32> to vector<16x16xf32>
    %46 = arith.truncf %45 : vector<16x16xf32> to vector<16x16xbf16>
    %c0_16 = arith.constant 0 : index
    %c0_17 = arith.constant 0 : index
    %c0_18 = arith.constant 0 : index
    %c0_19 = arith.constant 0 : index
    %47 = vector.load %arg7[%c0_16, %c0_17, %c0_18, %c0_19] : memref<1x4x16x16xbf16, #tpu.memory_space<vmem>>, vector<1x1x16x16xbf16>
    %48 = vector.shape_cast %47 : vector<1x1x16x16xbf16> to vector<16x16xbf16>
    %49 = vector.shape_cast %46 : vector<16x16xbf16> to vector<1x1x16x16xbf16>
    tpu.vector_store %arg7[%c0_16, %c0_17, %c0_18, %c0_19], %49 {strides = array<i32>} : memref<1x4x16x16xbf16, #tpu.memory_space<vmem>>, vector<1x1x16x16xbf16>,
    %50 = vector.extract_strided_slice %43 {offsets = [0, 0], sizes = [16, 16], strides = [1, 1]} : vector<16x64xf32> to vector<16x16xf32>
    %51 = arith.truncf %50 : vector<16x16xf32> to vector<16x16xbf16>
    %c0_20 = arith.constant 0 : index
    %c0_21 = arith.constant 0 : index
    %c0_22 = arith.constant 0 : index
    %c0_23 = arith.constant 0 : index
    %52 = vector.load %arg8[%c0_20, %c0_21, %c0_22, %c0_23] : memref<1x4x16x16xbf16, #tpu.memory_space<vmem>>, vector<1x1x16x16xbf16>
    %53 = vector.shape_cast %52 : vector<1x1x16x16xbf16> to vector<16x16xbf16>
    %54 = vector.shape_cast %51 : vector<16x16xbf16> to vector<1x1x16x16xbf16>
    tpu.vector_store %arg8[%c0_20, %c0_21, %c0_22, %c0_23], %54 {strides = array<i32>} : memref<1x4x16x16xbf16, #tpu.memory_space<vmem>>, vector<1x1x16x16xbf16>,
    %55 = vector.extract_strided_slice %44 {offsets = [0, 0], sizes = [16, 16], strides = [1, 1]} : vector<16x64xf32> to vector<16x16xf32>
    %56 = arith.truncf %55 : vector<16x16xf32> to vector<16x16xbf16>
    %c0_24 = arith.constant 0 : index
    %c0_25 = arith.constant 0 : index
    %c0_26 = arith.constant 0 : index
    %c0_27 = arith.constant 0 : index
    %57 = vector.load %arg9[%c0_24, %c0_25, %c0_26, %c0_27] : memref<1x4x16x16xbf16, #tpu.memory_space<vmem>>, vector<1x1x16x16xbf16>
    %58 = vector.shape_cast %57 : vector<1x1x16x16xbf16> to vector<16x16xbf16>
    %59 = vector.shape_cast %56 : vector<16x16xbf16> to vector<1x1x16x16xbf16>
    tpu.vector_store %arg9[%c0_24, %c0_25, %c0_26, %c0_27], %59 {strides = array<i32>} : memref<1x4x16x16xbf16, #tpu.memory_space<vmem>>, vector<1x1x16x16xbf16>,
    %60 = vector.extract_strided_slice %42 {offsets = [0, 16], sizes = [16, 16], strides = [1, 1]} : vector<16x64xf32> to vector<16x16xf32>
    %61 = arith.truncf %60 : vector<16x16xf32> to vector<16x16xbf16>
    %c0_28 = arith.constant 0 : index
    %c1 = arith.constant 1 : index
    %c0_29 = arith.constant 0 : index
    %c0_30 = arith.constant 0 : index
    %62 = vector.load %arg7[%c0_28, %c1, %c0_29, %c0_30] : memref<1x4x16x16xbf16, #tpu.memory_space<vmem>>, vector<1x1x16x16xbf16>
    %63 = vector.shape_cast %62 : vector<1x1x16x16xbf16> to vector<16x16xbf16>
    %64 = vector.shape_cast %61 : vector<16x16xbf16> to vector<1x1x16x16xbf16>
    tpu.vector_store %arg7[%c0_28, %c1, %c0_29, %c0_30], %64 {strides = array<i32>} : memref<1x4x16x16xbf16, #tpu.memory_space<vmem>>, vector<1x1x16x16xbf16>,
    %65 = vector.extract_strided_slice %43 {offsets = [0, 16], sizes = [16, 16], strides = [1, 1]} : vector<16x64xf32> to vector<16x16xf32>
    %66 = arith.truncf %65 : vector<16x16xf32> to vector<16x16xbf16>
    %c0_31 = arith.constant 0 : index
    %c1_32 = arith.constant 1 : index
    %c0_33 = arith.constant 0 : index
    %c0_34 = arith.constant 0 : index
    %67 = vector.load %arg8[%c0_31, %c1_32, %c0_33, %c0_34] : memref<1x4x16x16xbf16, #tpu.memory_space<vmem>>, vector<1x1x16x16xbf16>
    %68 = vector.shape_cast %67 : vector<1x1x16x16xbf16> to vector<16x16xbf16>
    %69 = vector.shape_cast %66 : vector<16x16xbf16> to vector<1x1x16x16xbf16>
    tpu.vector_store %arg8[%c0_31, %c1_32, %c0_33, %c0_34], %69 {strides = array<i32>} : memref<1x4x16x16xbf16, #tpu.memory_space<vmem>>, vector<1x1x16x16xbf16>,
    %70 = vector.extract_strided_slice %44 {offsets = [0, 16], sizes = [16, 16], strides = [1, 1]} : vector<16x64xf32> to vector<16x16xf32>
    %71 = arith.truncf %70 : vector<16x16xf32> to vector<16x16xbf16>
    %c0_35 = arith.constant 0 : index
    %c1_36 = arith.constant 1 : index
    %c0_37 = arith.constant 0 : index
    %c0_38 = arith.constant 0 : index
    %72 = vector.load %arg9[%c0_35, %c1_36, %c0_37, %c0_38] : memref<1x4x16x16xbf16, #tpu.memory_space<vmem>>, vector<1x1x16x16xbf16>
    %73 = vector.shape_cast %72 : vector<1x1x16x16xbf16> to vector<16x16xbf16>
    %74 = vector.shape_cast %71 : vector<16x16xbf16> to vector<1x1x16x16xbf16>
    tpu.vector_store %arg9[%c0_35, %c1_36, %c0_37, %c0_38], %74 {strides = array<i32>} : memref<1x4x16x16xbf16, #tpu.memory_space<vmem>>, vector<1x1x16x16xbf16>,
    %75 = vector.extract_strided_slice %42 {offsets = [0, 32], sizes = [16, 16], strides = [1, 1]} : vector<16x64xf32> to vector<16x16xf32>
    %76 = arith.truncf %75 : vector<16x16xf32> to vector<16x16xbf16>
    %c0_39 = arith.constant 0 : index
    %c2 = arith.constant 2 : index
    %c0_40 = arith.constant 0 : index
    %c0_41 = arith.constant 0 : index
    %77 = vector.load %arg7[%c0_39, %c2, %c0_40, %c0_41] : memref<1x4x16x16xbf16, #tpu.memory_space<vmem>>, vector<1x1x16x16xbf16>
    %78 = vector.shape_cast %77 : vector<1x1x16x16xbf16> to vector<16x16xbf16>
    %79 = vector.shape_cast %76 : vector<16x16xbf16> to vector<1x1x16x16xbf16>
    tpu.vector_store %arg7[%c0_39, %c2, %c0_40, %c0_41], %79 {strides = array<i32>} : memref<1x4x16x16xbf16, #tpu.memory_space<vmem>>, vector<1x1x16x16xbf16>,
    %80 = vector.extract_strided_slice %43 {offsets = [0, 32], sizes = [16, 16], strides = [1, 1]} : vector<16x64xf32> to vector<16x16xf32>
    %81 = arith.truncf %80 : vector<16x16xf32> to vector<16x16xbf16>
    %c0_42 = arith.constant 0 : index
    %c2_43 = arith.constant 2 : index
    %c0_44 = arith.constant 0 : index
    %c0_45 = arith.constant 0 : index
    %82 = vector.load %arg8[%c0_42, %c2_43, %c0_44, %c0_45] : memref<1x4x16x16xbf16, #tpu.memory_space<vmem>>, vector<1x1x16x16xbf16>
    %83 = vector.shape_cast %82 : vector<1x1x16x16xbf16> to vector<16x16xbf16>
    %84 = vector.shape_cast %81 : vector<16x16xbf16> to vector<1x1x16x16xbf16>
    tpu.vector_store %arg8[%c0_42, %c2_43, %c0_44, %c0_45], %84 {strides = array<i32>} : memref<1x4x16x16xbf16, #tpu.memory_space<vmem>>, vector<1x1x16x16xbf16>,
    %85 = vector.extract_strided_slice %44 {offsets = [0, 32], sizes = [16, 16], strides = [1, 1]} : vector<16x64xf32> to vector<16x16xf32>
    %86 = arith.truncf %85 : vector<16x16xf32> to vector<16x16xbf16>
    %c0_46 = arith.constant 0 : index
    %c2_47 = arith.constant 2 : index
    %c0_48 = arith.constant 0 : index
    %c0_49 = arith.constant 0 : index
    %87 = vector.load %arg9[%c0_46, %c2_47, %c0_48, %c0_49] : memref<1x4x16x16xbf16, #tpu.memory_space<vmem>>, vector<1x1x16x16xbf16>
    %88 = vector.shape_cast %87 : vector<1x1x16x16xbf16> to vector<16x16xbf16>
    %89 = vector.shape_cast %86 : vector<16x16xbf16> to vector<1x1x16x16xbf16>
    tpu.vector_store %arg9[%c0_46, %c2_47, %c0_48, %c0_49], %89 {strides = array<i32>} : memref<1x4x16x16xbf16, #tpu.memory_space<vmem>>, vector<1x1x16x16xbf16>,
    %90 = vector.extract_strided_slice %42 {offsets = [0, 48], sizes = [16, 16], strides = [1, 1]} : vector<16x64xf32> to vector<16x16xf32>
    %91 = arith.truncf %90 : vector<16x16xf32> to vector<16x16xbf16>
    %c0_50 = arith.constant 0 : index
    %c3 = arith.constant 3 : index
    %c0_51 = arith.constant 0 : index
    %c0_52 = arith.constant 0 : index
    %92 = vector.load %arg7[%c0_50, %c3, %c0_51, %c0_52] : memref<1x4x16x16xbf16, #tpu.memory_space<vmem>>, vector<1x1x16x16xbf16>
    %93 = vector.shape_cast %92 : vector<1x1x16x16xbf16> to vector<16x16xbf16>
    %94 = vector.shape_cast %91 : vector<16x16xbf16> to vector<1x1x16x16xbf16>
    tpu.vector_store %arg7[%c0_50, %c3, %c0_51, %c0_52], %94 {strides = array<i32>} : memref<1x4x16x16xbf16, #tpu.memory_space<vmem>>, vector<1x1x16x16xbf16>,
    %95 = vector.extract_strided_slice %43 {offsets = [0, 48], sizes = [16, 16], strides = [1, 1]} : vector<16x64xf32> to vector<16x16xf32>
    %96 = arith.truncf %95 : vector<16x16xf32> to vector<16x16xbf16>
    %c0_53 = arith.constant 0 : index
    %c3_54 = arith.constant 3 : index
    %c0_55 = arith.constant 0 : index
    %c0_56 = arith.constant 0 : index
    %97 = vector.load %arg8[%c0_53, %c3_54, %c0_55, %c0_56] : memref<1x4x16x16xbf16, #tpu.memory_space<vmem>>, vector<1x1x16x16xbf16>
    %98 = vector.shape_cast %97 : vector<1x1x16x16xbf16> to vector<16x16xbf16>
    %99 = vector.shape_cast %96 : vector<16x16xbf16> to vector<1x1x16x16xbf16>
    tpu.vector_store %arg8[%c0_53, %c3_54, %c0_55, %c0_56], %99 {strides = array<i32>} : memref<1x4x16x16xbf16, #tpu.memory_space<vmem>>, vector<1x1x16x16xbf16>,
    %100 = vector.extract_strided_slice %44 {offsets = [0, 48], sizes = [16, 16], strides = [1, 1]} : vector<16x64xf32> to vector<16x16xf32>
    %101 = arith.truncf %100 : vector<16x16xf32> to vector<16x16xbf16>
    %c0_57 = arith.constant 0 : index
    %c3_58 = arith.constant 3 : index
    %c0_59 = arith.constant 0 : index
    %c0_60 = arith.constant 0 : index
    %102 = vector.load %arg9[%c0_57, %c3_58, %c0_59, %c0_60] : memref<1x4x16x16xbf16, #tpu.memory_space<vmem>>, vector<1x1x16x16xbf16>
    %103 = vector.shape_cast %102 : vector<1x1x16x16xbf16> to vector<16x16xbf16>
    %104 = vector.shape_cast %101 : vector<16x16xbf16> to vector<1x1x16x16xbf16>
    tpu.vector_store %arg9[%c0_57, %c3_58, %c0_59, %c0_60], %104 {strides = array<i32>} : memref<1x4x16x16xbf16, #tpu.memory_space<vmem>>, vector<1x1x16x16xbf16>,
    return
  }
  func.func @transform_0(%arg0: i32, %arg1: i32) -> (i32, i32, i32) {
    %c0_i32 = arith.constant 0 : i32
    %c0_i32_0 = arith.constant 0 : i32
    return %arg0, %arg1, %c0_i32 : i32, i32, i32
  }
  func.func @transform_1(%arg0: i32, %arg1: i32) -> (i32, i32) {
    %c0_i32 = arith.constant 0 : i32
    %c0_i32_0 = arith.constant 0 : i32
    %c0_i32_1 = arith.constant 0 : i32
    return %c0_i32, %c0_i32_0 : i32, i32
  }
  func.func @transform_2(%arg0: i32, %arg1: i32) -> (i32, i32) {
    %c0_i32 = arith.constant 0 : i32
    %c0_i32_0 = arith.constant 0 : i32
    %c0_i32_1 = arith.constant 0 : i32
    return %c0_i32, %c0_i32_0 : i32, i32
  }
  func.func @transform_3(%arg0: i32, %arg1: i32) -> (i32, i32) {
    %c0_i32 = arith.constant 0 : i32
    %c0_i32_0 = arith.constant 0 : i32
    %c0_i32_1 = arith.constant 0 : i32
    return %c0_i32, %c0_i32_0 : i32, i32
  }
  func.func @transform_4(%arg0: i32, %arg1: i32) -> (i32, i32) {
    %c0_i32 = arith.constant 0 : i32
    %c0_i32_0 = arith.constant 0 : i32
    %c0_i32_1 = arith.constant 0 : i32
    return %c0_i32, %c0_i32_0 : i32, i32
  }
  func.func @transform_5(%arg0: i32, %arg1: i32) -> (i32, i32, i32, i32) {
    %c0_i32 = arith.constant 0 : i32
    %c0_i32_0 = arith.constant 0 : i32
    %c0_i32_1 = arith.constant 0 : i32
    return %arg0, %c0_i32, %arg1, %c0_i32_0 : i32, i32, i32, i32
  }
  func.func @transform_6(%arg0: i32, %arg1: i32) -> (i32, i32, i32, i32) {
    %c0_i32 = arith.constant 0 : i32
    %c0_i32_0 = arith.constant 0 : i32
    %c0_i32_1 = arith.constant 0 : i32
    return %arg0, %c0_i32, %arg1, %c0_i32_0 : i32, i32, i32, i32
  }
  func.func @transform_7(%arg0: i32, %arg1: i32) -> (i32, i32, i32, i32) {
    %c0_i32 = arith.constant 0 : i32
    %c0_i32_0 = arith.constant 0 : i32
    %c0_i32_1 = arith.constant 0 : i32
    return %arg0, %c0_i32, %arg1, %c0_i32_0 : i32, i32, i32, i32
  }
}

module attributes {stable_mosaic.version = 11 : i64} {
  func.func @_qkv_kernel(%arg0: i32, %arg1: i32, %arg2: memref<1x16x64xf32, #tpu.memory_space<vmem>>, %arg3: memref<1x64xf32, #tpu.memory_space<vmem>>, %arg4: memref<1x64xf32, #tpu.memory_space<vmem>>, %arg5: memref<64x192xbf16, #tpu.memory_space<vmem>>, %arg6: memref<1x192xf32, #tpu.memory_space<vmem>>, %arg7: memref<1x4x16x16xbf16, #tpu.memory_space<vmem>>, %arg8: memref<1x4x16x16xbf16, #tpu.memory_space<vmem>>, %arg9: memref<1x4x16x16xbf16, #tpu.memory_space<vmem>>) attributes {dimension_semantics = [#tpu.dimension_semantics<parallel>, #tpu.dimension_semantics<parallel>], iteration_bounds = array<i64: 2, 2>, scalar_prefetch = 0 : i64, scratch_operands = 0 : i64, tpu.core_type = #tpu.core_type<tc>, window_params = [{transform_indices = @transform_0, window_bounds = array<i64: 1, 16, 64>}, {pipeline_mode = #tpu.pipeline_mode<synchronous>, transform_indices = @transform_1, window_bounds = array<i64: 1, 64>}, {pipeline_mode = #tpu.pipeline_mode<synchronous>, transform_indices = @transform_2, window_bounds = array<i64: 1, 64>}, {pipeline_mode = #tpu.pipeline_mode<synchronous>, transform_indices = @transform_3, window_bounds = array<i64: 64, 192>}, {pipeline_mode = #tpu.pipeline_mode<synchronous>, transform_indices = @transform_4, window_bounds = array<i64: 1, 192>}, {transform_indices = @transform_5, window_bounds = array<i64: 1, 4, 16, 16>}, {transform_indices = @transform_6, window_bounds = array<i64: 1, 4, 16, 16>}, {transform_indices = @transform_7, window_bounds = array<i64: 1, 4, 16, 16>}]} {
    %c0 = arith.constant 0 : index
    %c0_0 = arith.constant 0 : index
    %c0_1 = arith.constant 0 : index
    %0 = vector.load %arg2[%c0, %c0_0, %c0_1] : memref<1x16x64xf32, #tpu.memory_space<vmem>>, vector<1x16x64xf32>
    %1 = vector.shape_cast %0 : vector<1x16x64xf32> to vector<16x64xf32>
    %c0_2 = arith.constant 0 : index
    %c0_3 = arith.constant 0 : index
    %2 = vector.load %arg3[%c0_2, %c0_3] : memref<1x64xf32, #tpu.memory_space<vmem>>, vector<1x64xf32>
    %3 = vector.shape_cast %2 : vector<1x64xf32> to vector<64xf32>
    %c0_4 = arith.constant 0 : index
    %c0_5 = arith.constant 0 : index
    %4 = vector.load %arg4[%c0_4, %c0_5] : memref<1x64xf32, #tpu.memory_space<vmem>>, vector<1x64xf32>
    %5 = vector.shape_cast %4 : vector<1x64xf32> to vector<64xf32>
    %cst = arith.constant dense<0.000000e+00> : vector<16xf32>
    %6 = vector.multi_reduction <add>, %1, %cst [1] : vector<16x64xf32> to vector<16xf32>
    %7 = vector.shape_cast %6 : vector<16xf32> to vector<16x1xf32>
    %cst_6 = arith.constant 6.400000e+01 : f32
    %8 = vector.broadcast %cst_6 : f32 to vector<16x1xf32>
    %9 = arith.divf %7, %8 : vector<16x1xf32>
    %10 = vector.broadcast %9 : vector<16x1xf32> to vector<16x64xf32>
    %11 = arith.subf %1, %10 : vector<16x64xf32>
    %12 = vector.broadcast %9 : vector<16x1xf32> to vector<16x64xf32>
    %13 = arith.subf %1, %12 : vector<16x64xf32>
    %14 = arith.mulf %11, %13 : vector<16x64xf32>
    %cst_7 = arith.constant dense<0.000000e+00> : vector<16xf32>
    %15 = vector.multi_reduction <add>, %14, %cst_7 [1] : vector<16x64xf32> to vector<16xf32>
    %16 = vector.shape_cast %15 : vector<16xf32> to vector<16x1xf32>
    %cst_8 = arith.constant 6.400000e+01 : f32
    %17 = vector.broadcast %cst_8 : f32 to vector<16x1xf32>
    %18 = arith.divf %16, %17 : vector<16x1xf32>
    %19 = vector.broadcast %9 : vector<16x1xf32> to vector<16x64xf32>
    %20 = arith.subf %1, %19 : vector<16x64xf32>
    %cst_9 = arith.constant 9.99999974E-6 : f32
    %21 = vector.broadcast %cst_9 : f32 to vector<16x1xf32>
    %22 = arith.addf %18, %21 : vector<16x1xf32>
    %23 = math.rsqrt %22 : vector<16x1xf32>
    %24 = vector.broadcast %23 : vector<16x1xf32> to vector<16x64xf32>
    %25 = arith.mulf %20, %24 : vector<16x64xf32>
    %26 = vector.shape_cast %3 : vector<64xf32> to vector<1x64xf32>
    %27 = vector.broadcast %26 : vector<1x64xf32> to vector<16x64xf32>
    %28 = arith.mulf %25, %27 : vector<16x64xf32>
    %29 = vector.shape_cast %5 : vector<64xf32> to vector<1x64xf32>
    %30 = vector.broadcast %29 : vector<1x64xf32> to vector<16x64xf32>
    %31 = arith.addf %28, %30 : vector<16x64xf32>
    %32 = arith.truncf %31 : vector<16x64xf32> to vector<16x64xbf16>
    %c0_10 = arith.constant 0 : index
    %c0_11 = arith.constant 0 : index
    %33 = vector.load %arg5[%c0_10, %c0_11] : memref<64x192xbf16, #tpu.memory_space<vmem>>, vector<64x192xbf16>
    %cst_12 = arith.constant dense<0.000000e+00> : vector<16x192xf32>
    %34 = tpu.matmul %32, %33, %cst_12 {dimension_numbers = #tpu.dot_dimension_numbers<[1], [0], [0], [1], [0, 0, 1, 1], [], []>} : vector<16x64xbf16>, vector<64x192xbf16>, vector<16x192xf32> -> vector<16x192xf32>
    %c0_13 = arith.constant 0 : index
    %c0_14 = arith.constant 0 : index
    %35 = vector.load %arg6[%c0_13, %c0_14] : memref<1x192xf32, #tpu.memory_space<vmem>>, vector<1x192xf32>
    %36 = vector.shape_cast %35 : vector<1x192xf32> to vector<192xf32>
    %37 = vector.shape_cast %36 : vector<192xf32> to vector<1x192xf32>
    %38 = vector.broadcast %37 : vector<1x192xf32> to vector<16x192xf32>
    %39 = arith.addf %34, %38 : vector<16x192xf32>
    %40 = vector.extract_strided_slice %39 {offsets = [0, 0], sizes = [16, 64], strides = [1, 1]} : vector<16x192xf32> to vector<16x64xf32>
    %cst_15 = arith.constant 2.500000e-01 : f32
    %41 = vector.broadcast %cst_15 : f32 to vector<16x64xf32>
    %42 = arith.mulf %40, %41 : vector<16x64xf32>
    %43 = vector.extract_strided_slice %39 {offsets = [0, 64], sizes = [16, 64], strides = [1, 1]} : vector<16x192xf32> to vector<16x64xf32>
    %44 = vector.extract_strided_slice %39 {offsets = [0, 128], sizes = [16, 64], strides = [1, 1]} : vector<16x192xf32> to vector<16x64xf32>
    %45 = vector.extract_strided_slice %42 {offsets = [0, 0], sizes = [16, 16], strides = [1, 1]} : vector<16x64xf32> to vector<16x16xf32>
    %46 = arith.truncf %45 : vector<16x16xf32> to vector<16x16xbf16>
    %c0_16 = arith.constant 0 : index
    %c0_17 = arith.constant 0 : index
    %c0_18 = arith.constant 0 : index
    %c0_19 = arith.constant 0 : index
    %47 = vector.load %arg7[%c0_16, %c0_17, %c0_18, %c0_19] : memref<1x4x16x16xbf16, #tpu.memory_space<vmem>>, vector<1x1x16x16xbf16>
    %48 = vector.shape_cast %47 : vector<1x1x16x16xbf16> to vector<16x16xbf16>
    %49 = vector.shape_cast %46 : vector<16x16xbf16> to vector<1x1x16x16xbf16>
    tpu.vector_store %arg7[%c0_16, %c0_17, %c0_18, %c0_19], %49 {strides = array<i32>} : memref<1x4x16x16xbf16, #tpu.memory_space<vmem>>, vector<1x1x16x16xbf16>,
    %50 = vector.extract_strided_slice %43 {offsets = [0, 0], sizes = [16, 16], strides = [1, 1]} : vector<16x64xf32> to vector<16x16xf32>
    %51 = arith.truncf %50 : vector<16x16xf32> to vector<16x16xbf16>
    %c0_20 = arith.constant 0 : index
    %c0_21 = arith.constant 0 : index
    %c0_22 = arith.constant 0 : index
    %c0_23 = arith.constant 0 : index
    %52 = vector.load %arg8[%c0_20, %c0_21, %c0_22, %c0_23] : memref<1x4x16x16xbf16, #tpu.memory_space<vmem>>, vector<1x1x16x16xbf16>
    %53 = vector.shape_cast %52 : vector<1x1x16x16xbf16> to vector<16x16xbf16>
    %54 = vector.shape_cast %51 : vector<16x16xbf16> to vector<1x1x16x16xbf16>
    tpu.vector_store %arg8[%c0_20, %c0_21, %c0_22, %c0_23], %54 {strides = array<i32>} : memref<1x4x16x16xbf16, #tpu.memory_space<vmem>>, vector<1x1x16x16xbf16>,
    %55 = vector.extract_strided_slice %44 {offsets = [0, 0], sizes = [16, 16], strides = [1, 1]} : vector<16x64xf32> to vector<16x16xf32>
    %56 = arith.truncf %55 : vector<16x16xf32> to vector<16x16xbf16>
    %c0_24 = arith.constant 0 : index
    %c0_25 = arith.constant 0 : index
    %c0_26 = arith.constant 0 : index
    %c0_27 = arith.constant 0 : index
    %57 = vector.load %arg9[%c0_24, %c0_25, %c0_26, %c0_27] : memref<1x4x16x16xbf16, #tpu.memory_space<vmem>>, vector<1x1x16x16xbf16>
    %58 = vector.shape_cast %57 : vector<1x1x16x16xbf16> to vector<16x16xbf16>
    %59 = vector.shape_cast %56 : vector<16x16xbf16> to vector<1x1x16x16xbf16>
    tpu.vector_store %arg9[%c0_24, %c0_25, %c0_26, %c0_27], %59 {strides = array<i32>} : memref<1x4x16x16xbf16, #tpu.memory_space<vmem>>, vector<1x1x16x16xbf16>,
    %60 = vector.extract_strided_slice %42 {offsets = [0, 16], sizes = [16, 16], strides = [1, 1]} : vector<16x64xf32> to vector<16x16xf32>
    %61 = arith.truncf %60 : vector<16x16xf32> to vector<16x16xbf16>
    %c0_28 = arith.constant 0 : index
    %c1 = arith.constant 1 : index
    %c0_29 = arith.constant 0 : index
    %c0_30 = arith.constant 0 : index
    %62 = vector.load %arg7[%c0_28, %c1, %c0_29, %c0_30] : memref<1x4x16x16xbf16, #tpu.memory_space<vmem>>, vector<1x1x16x16xbf16>
    %63 = vector.shape_cast %62 : vector<1x1x16x16xbf16> to vector<16x16xbf16>
    %64 = vector.shape_cast %61 : vector<16x16xbf16> to vector<1x1x16x16xbf16>
    tpu.vector_store %arg7[%c0_28, %c1, %c0_29, %c0_30], %64 {strides = array<i32>} : memref<1x4x16x16xbf16, #tpu.memory_space<vmem>>, vector<1x1x16x16xbf16>,
    %65 = vector.extract_strided_slice %43 {offsets = [0, 16], sizes = [16, 16], strides = [1, 1]} : vector<16x64xf32> to vector<16x16xf32>
    %66 = arith.truncf %65 : vector<16x16xf32> to vector<16x16xbf16>
    %c0_31 = arith.constant 0 : index
    %c1_32 = arith.constant 1 : index
    %c0_33 = arith.constant 0 : index
    %c0_34 = arith.constant 0 : index
    %67 = vector.load %arg8[%c0_31, %c1_32, %c0_33, %c0_34] : memref<1x4x16x16xbf16, #tpu.memory_space<vmem>>, vector<1x1x16x16xbf16>
    %68 = vector.shape_cast %67 : vector<1x1x16x16xbf16> to vector<16x16xbf16>
    %69 = vector.shape_cast %66 : vector<16x16xbf16> to vector<1x1x16x16xbf16>
    tpu.vector_store %arg8[%c0_31, %c1_32, %c0_33, %c0_34], %69 {strides = array<i32>} : memref<1x4x16x16xbf16, #tpu.memory_space<vmem>>, vector<1x1x16x16xbf16>,
    %70 = vector.extract_strided_slice %44 {offsets = [0, 16], sizes = [16, 16], strides = [1, 1]} : vector<16x64xf32> to vector<16x16xf32>
    %71 = arith.truncf %70 : vector<16x16xf32> to vector<16x16xbf16>
    %c0_35 = arith.constant 0 : index
    %c1_36 = arith.constant 1 : index
    %c0_37 = arith.constant 0 : index
    %c0_38 = arith.constant 0 : index
    %72 = vector.load %arg9[%c0_35, %c1_36, %c0_37, %c0_38] : memref<1x4x16x16xbf16, #tpu.memory_space<vmem>>, vector<1x1x16x16xbf16>
    %73 = vector.shape_cast %72 : vector<1x1x16x16xbf16> to vector<16x16xbf16>
    %74 = vector.shape_cast %71 : vector<16x16xbf16> to vector<1x1x16x16xbf16>
    tpu.vector_store %arg9[%c0_35, %c1_36, %c0_37, %c0_38], %74 {strides = array<i32>} : memref<1x4x16x16xbf16, #tpu.memory_space<vmem>>, vector<1x1x16x16xbf16>,
    %75 = vector.extract_strided_slice %42 {offsets = [0, 32], sizes = [16, 16], strides = [1, 1]} : vector<16x64xf32> to vector<16x16xf32>
    %76 = arith.truncf %75 : vector<16x16xf32> to vector<16x16xbf16>
    %c0_39 = arith.constant 0 : index
    %c2 = arith.constant 2 : index
    %c0_40 = arith.constant 0 : index
    %c0_41 = arith.constant 0 : index
    %77 = vector.load %arg7[%c0_39, %c2, %c0_40, %c0_41] : memref<1x4x16x16xbf16, #tpu.memory_space<vmem>>, vector<1x1x16x16xbf16>
    %78 = vector.shape_cast %77 : vector<1x1x16x16xbf16> to vector<16x16xbf16>
    %79 = vector.shape_cast %76 : vector<16x16xbf16> to vector<1x1x16x16xbf16>
    tpu.vector_store %arg7[%c0_39, %c2, %c0_40, %c0_41], %79 {strides = array<i32>} : memref<1x4x16x16xbf16, #tpu.memory_space<vmem>>, vector<1x1x16x16xbf16>,
    %80 = vector.extract_strided_slice %43 {offsets = [0, 32], sizes = [16, 16], strides = [1, 1]} : vector<16x64xf32> to vector<16x16xf32>
    %81 = arith.truncf %80 : vector<16x16xf32> to vector<16x16xbf16>
    %c0_42 = arith.constant 0 : index
    %c2_43 = arith.constant 2 : index
    %c0_44 = arith.constant 0 : index
    %c0_45 = arith.constant 0 : index
    %82 = vector.load %arg8[%c0_42, %c2_43, %c0_44, %c0_45] : memref<1x4x16x16xbf16, #tpu.memory_space<vmem>>, vector<1x1x16x16xbf16>
    %83 = vector.shape_cast %82 : vector<1x1x16x16xbf16> to vector<16x16xbf16>
    %84 = vector.shape_cast %81 : vector<16x16xbf16> to vector<1x1x16x16xbf16>
    tpu.vector_store %arg8[%c0_42, %c2_43, %c0_44, %c0_45], %84 {strides = array<i32>} : memref<1x4x16x16xbf16, #tpu.memory_space<vmem>>, vector<1x1x16x16xbf16>,
    %85 = vector.extract_strided_slice %44 {offsets = [0, 32], sizes = [16, 16], strides = [1, 1]} : vector<16x64xf32> to vector<16x16xf32>
    %86 = arith.truncf %85 : vector<16x16xf32> to vector<16x16xbf16>
    %c0_46 = arith.constant 0 : index
    %c2_47 = arith.constant 2 : index
    %c0_48 = arith.constant 0 : index
    %c0_49 = arith.constant 0 : index
    %87 = vector.load %arg9[%c0_46, %c2_47, %c0_48, %c0_49] : memref<1x4x16x16xbf16, #tpu.memory_space<vmem>>, vector<1x1x16x16xbf16>
    %88 = vector.shape_cast %87 : vector<1x1x16x16xbf16> to vector<16x16xbf16>
    %89 = vector.shape_cast %86 : vector<16x16xbf16> to vector<1x1x16x16xbf16>
    tpu.vector_store %arg9[%c0_46, %c2_47, %c0_48, %c0_49], %89 {strides = array<i32>} : memref<1x4x16x16xbf16, #tpu.memory_space<vmem>>, vector<1x1x16x16xbf16>,
    %90 = vector.extract_strided_slice %42 {offsets = [0, 48], sizes = [16, 16], strides = [1, 1]} : vector<16x64xf32> to vector<16x16xf32>
    %91 = arith.truncf %90 : vector<16x16xf32> to vector<16x16xbf16>
    %c0_50 = arith.constant 0 : index
    %c3 = arith.constant 3 : index
    %c0_51 = arith.constant 0 : index
    %c0_52 = arith.constant 0 : index
    %92 = vector.load %arg7[%c0_50, %c3, %c0_51, %c0_52] : memref<1x4x16x16xbf16, #tpu.memory_space<vmem>>, vector<1x1x16x16xbf16>
    %93 = vector.shape_cast %92 : vector<1x1x16x16xbf16> to vector<16x16xbf16>
    %94 = vector.shape_cast %91 : vector<16x16xbf16> to vector<1x1x16x16xbf16>
    tpu.vector_store %arg7[%c0_50, %c3, %c0_51, %c0_52], %94 {strides = array<i32>} : memref<1x4x16x16xbf16, #tpu.memory_space<vmem>>, vector<1x1x16x16xbf16>,
    %95 = vector.extract_strided_slice %43 {offsets = [0, 48], sizes = [16, 16], strides = [1, 1]} : vector<16x64xf32> to vector<16x16xf32>
    %96 = arith.truncf %95 : vector<16x16xf32> to vector<16x16xbf16>
    %c0_53 = arith.constant 0 : index
    %c3_54 = arith.constant 3 : index
    %c0_55 = arith.constant 0 : index
    %c0_56 = arith.constant 0 : index
    %97 = vector.load %arg8[%c0_53, %c3_54, %c0_55, %c0_56] : memref<1x4x16x16xbf16, #tpu.memory_space<vmem>>, vector<1x1x16x16xbf16>
    %98 = vector.shape_cast %97 : vector<1x1x16x16xbf16> to vector<16x16xbf16>
    %99 = vector.shape_cast %96 : vector<16x16xbf16> to vector<1x1x16x16xbf16>
    tpu.vector_store %arg8[%c0_53, %c3_54, %c0_55, %c0_56], %99 {strides = array<i32>} : memref<1x4x16x16xbf16, #tpu.memory_space<vmem>>, vector<1x1x16x16xbf16>,
    %100 = vector.extract_strided_slice %44 {offsets = [0, 48], sizes = [16, 16], strides = [1, 1]} : vector<16x64xf32> to vector<16x16xf32>
    %101 = arith.truncf %100 : vector<16x16xf32> to vector<16x16xbf16>
    %c0_57 = arith.constant 0 : index
    %c3_58 = arith.constant 3 : index
    %c0_59 = arith.constant 0 : index
    %c0_60 = arith.constant 0 : index
    %102 = vector.load %arg9[%c0_57, %c3_58, %c0_59, %c0_60] : memref<1x4x16x16xbf16, #tpu.memory_space<vmem>>, vector<1x1x16x16xbf16>
    %103 = vector.shape_cast %102 : vector<1x1x16x16xbf16> to vector<16x16xbf16>
    %104 = vector.shape_cast %101 : vector<16x16xbf16> to vector<1x1x16x16xbf16>
    tpu.vector_store %arg9[%c0_57, %c3_58, %c0_59, %c0_60], %104 {strides = array<i32>} : memref<1x4x16x16xbf16, #tpu.memory_space<vmem>>, vector<1x1x16x16xbf16>,
    return
  }
  func.func @transform_0(%arg0: i32, %arg1: i32) -> (i32, i32, i32) {
    %c0_i32 = arith.constant 0 : i32
    %c0_i32_0 = arith.constant 0 : i32
    return %arg0, %arg1, %c0_i32 : i32, i32, i32
  }
  func.func @transform_1(%arg0: i32, %arg1: i32) -> (i32, i32) {
    %c0_i32 = arith.constant 0 : i32
    %c0_i32_0 = arith.constant 0 : i32
    %c0_i32_1 = arith.constant 0 : i32
    return %c0_i32, %c0_i32_0 : i32, i32
  }
  func.func @transform_2(%arg0: i32, %arg1: i32) -> (i32, i32) {
    %c0_i32 = arith.constant 0 : i32
    %c0_i32_0 = arith.constant 0 : i32
    %c0_i32_1 = arith.constant 0 : i32
    return %c0_i32, %c0_i32_0 : i32, i32
  }
  func.func @transform_3(%arg0: i32, %arg1: i32) -> (i32, i32) {
    %c0_i32 = arith.constant 0 : i32
    %c0_i32_0 = arith.constant 0 : i32
    %c0_i32_1 = arith.constant 0 : i32
    return %c0_i32, %c0_i32_0 : i32, i32
  }
  func.func @transform_4(%arg0: i32, %arg1: i32) -> (i32, i32) {
    %c0_i32 = arith.constant 0 : i32
    %c0_i32_0 = arith.constant 0 : i32
    %c0_i32_1 = arith.constant 0 : i32
    return %c0_i32, %c0_i32_0 : i32, i32
  }
  func.func @transform_5(%arg0: i32, %arg1: i32) -> (i32, i32, i32, i32) {
    %c0_i32 = arith.constant 0 : i32
    %c0_i32_0 = arith.constant 0 : i32
    %c0_i32_1 = arith.constant 0 : i32
    return %arg0, %c0_i32, %arg1, %c0_i32_0 : i32, i32, i32, i32
  }
  func.func @transform_6(%arg0: i32, %arg1: i32) -> (i32, i32, i32, i32) {
    %c0_i32 = arith.constant 0 : i32
    %c0_i32_0 = arith.constant 0 : i32
    %c0_i32_1 = arith.constant 0 : i32
    return %arg0, %c0_i32, %arg1, %c0_i32_0 : i32, i32, i32, i32
  }
  func.func @transform_7(%arg0: i32, %arg1: i32) -> (i32, i32, i32, i32) {
    %c0_i32 = arith.constant 0 : i32
    %c0_i32_0 = arith.constant 0 : i32
    %c0_i32_1 = arith.constant 0 : i32
    return %arg0, %c0_i32, %arg1, %c0_i32_0 : i32, i32, i32, i32
  }
}

</mosaic_0001>

<llo_original>
// kernel: tpu_custom_call.1
$region0: #{tpu_custom_call.1}
  #allocation0 [shape = 'u32[]', space=smem, size = 0x4, offset = 0x4, fixed_abs, tag = 'smem constant byte address 0x4 - core index']
  #allocation1 [shape = 'u32[72,128]{1,0:T(1,128)}', space=vmem, size = 0x9000, scoped, tag = 'internal scratch']
  %s0 = inlined_call_operand.hbm [shape: f32[2,32,64], index: 0, kind: input, shape index: {}]
  %s1 = inlined_call_operand.hbm [shape: f32[1,64], index: 1, kind: input, shape index: {}]
  %s2 = inlined_call_operand.vmem [shape: f32[1,64], index: 2, kind: input, shape index: {}]
  %s3 = inlined_call_operand.hbm [shape: bf16[64,192], index: 3, kind: input, shape index: {}]
  %s4 = inlined_call_operand.vmem [shape: f32[1,192], index: 4, kind: input, shape index: {}]
  %s5 = inlined_call_operand.vmem [shape: bf16[2,4,32,16], index: 5, kind: output, shape index: {0}]
  %s6 = inlined_call_operand.vmem [shape: bf16[2,4,32,16], index: 6, kind: output, shape index: {1}]
  %s7 = inlined_call_operand.vmem [shape: bf16[2,4,32,16], index: 7, kind: output, shape index: {2}]
  %8 = xla_tuple %s5, %s6, %s7
  %s9 = sld [smem:[#allocation0]]
  $region192: #{tpu_custom_call.1} parent=0
    _
  %s11 = ssub.s32 1, %s9
  %s12 = scalar_select 0, %s11, %s9
  $region1: #{tpu_custom_call.1} parent=0
    #allocation2 [shape = 'u8[16384]{0}', space=vmem, size = 0x4000, scoped, tag = 'input window, operand 0']
    #allocation3 [shape = 's32[2]{0}', space=sflag, size = 0x8, scoped, tag = 'scoped memory for tpu_custom_call.1']
    #allocation4 [shape = 'u8[512]{0}', space=vmem, size = 0x400, scoped, tag = 'input window, operand 1, single buffered']
    #allocation5 [shape = 's32[1]{0}', space=sflag, size = 0x4, scoped, tag = 'scoped memory for tpu_custom_call.1']
    #allocation6 [shape = 'u8[32768]{0}', space=vmem, size = 0x8000, scoped, tag = 'input window, operand 3, single buffered']
    #allocation7 [shape = 'u8[32768]{0}', space=vmem, size = 0x8000, scoped, tag = 'output window, operand 0']
    #allocation8 [shape = 'u8[32768]{0}', space=vmem, size = 0x8000, scoped, tag = 'output window, operand 1']
    #allocation9 [shape = 'u8[32768]{0}', space=vmem, size = 0x8000, scoped, tag = 'output window, operand 2']
    %13 = vsyncpa [#allocation3], 0
    %s14 = scalar_lea.sflag [#allocation3], 1
    %15 = vsyncpa %s14, 0
    %16 = vsyncpa [#allocation5], 0
    loop: start=0, step=1, limit=6
    $region2: #{tpu_custom_call.1} parent=1 // loop_pre_header
      _
    $region3: #{tpu_custom_call.1} parent=1 // loop_header
      %s18 = sphi 0, %s22
      %p19 = scmp.ge.s32.totalorder %s18, 6
      %s25 = sphi 0, %s37
      %s26 = sphi 0, %s33
      %s27 = sphi 0, %s25
      %s28 = sphi 0, %s26
      %s29 = sphi 0, %s27
      %s30 = sphi 0, %s28
      %s42 = sphi 0, %s44
      %s45 = sphi 0, %s42
      %s46 = sphi 0, %s45
      %s62 = sphi 0, %s46
      %s66 = sphi 0, %s66
      %s68 = sphi 0, %s66
      %s69 = sphi 0, %s68
      %s83 = sphi 0, %s69
      %s87 = sphi 0, %s87
      %s89 = sphi 0, %s87
      %s90 = sphi 0, %s89
      %s104 = sphi 0, %s90
      %s108 = sphi 0, %s108
      %s110 = sphi 0, %s108
      %s111 = sphi 0, %s110
      %s125 = sphi 0, %s111
      %s129 = sphi 0, %s129
      %s131 = sphi 0, %s129
      %s132 = sphi 0, %s131
      %s146 = sphi 0, %s132
      %s154 = sphi 0, %s156
      %s157 = sphi 0, %s154
      %s158 = sphi 0, %s157
      %s174 = sphi 0, %s158
      %s182 = sphi 0, %s184
      %s185 = sphi 0, %s182
      %s186 = sphi 0, %s185
      %s202 = sphi 0, %s186
      %s210 = sphi 0, %s212
      %s213 = sphi 0, %s210
      %s214 = sphi 0, %s213
      %s230 = sphi 0, %s214
    $region4: #{tpu_custom_call.1} parent=1 // loop_header_branch
      %21 = sbr.rel (%p19) target = $region8
    $region5: #{tpu_custom_call.1} parent=1 // loop_body
      %s23 = ssub.s32 %s18, 1
      %s24 = ssub.s32 %s18, 2
      %s31 = sadd.s32 1, %s26
      %p32 = scmp.ge.s32.totalorder %s31, 2
      %s33 = scalar_select %p32, 0, %s31
      %s34 = sadd.s32 1, %s25
      %s35 = scalar_select %p32, %s34, %s25
      %p36 = scmp.ge.s32.totalorder %s35, 2
      %s37 = scalar_select %p36, 0, %s35
      %s38 = ssub.s32 %s25, %s37
      %s39 = ssub.s32 %s26, %s33
      %s40 = sor.u32 %s38, %s39
      %p41 = scmp.eq.s32.totalorder %s40, 0
      %s43 = sadd.s32 %s42, 1
      %s44 = scalar_select %p41, %s42, %s43
      %p47 = pneg %p41
      %p48 = scmp.eq.s32.totalorder %s18, 3
      %p49 = por %p47, %p48
      %p50 = scmp.ne.s32.totalorder %s42, %s45
      %p51 = scmp.eq.s32.totalorder %s18, 0
      %p52 = por %p50, %p51
      %p53 = scmp.ne.s32.totalorder %s42, %s45
      %p54 = scmp.eq.s32.totalorder %s23, 3
      %p55 = por %p53, %p54
      %p56 = scmp.ne.s32.totalorder %s45, %s46
      %p57 = scmp.eq.s32.totalorder %s23, 0
      %p58 = por %p56, %p57
      %p59 = scmp.ne.s32.totalorder %s45, %s46
      %p60 = scmp.eq.s32.totalorder %s24, 3
      %p61 = por %p59, %p60
      %p63 = scmp.ne.s32.totalorder %s46, %s62
      %p64 = scmp.eq.s32.totalorder %s24, 0
      %p65 = por %p63, %p64
      %s67 = sadd.s32 %s66, 1
      %p70 = scmp.eq.s32.totalorder %s18, 3
      %p71 = scmp.ne.s32.totalorder %s66, %s68
      %p72 = scmp.eq.s32.totalorder %s18, 0
      %p73 = por %p71, %p72
      %p74 = scmp.ne.s32.totalorder %s66, %s68
      %p75 = scmp.eq.s32.totalorder %s23, 3
      %p76 = por %p74, %p75
      %p77 = scmp.ne.s32.totalorder %s68, %s69
      %p78 = scmp.eq.s32.totalorder %s23, 0
      %p79 = por %p77, %p78
      %p80 = scmp.ne.s32.totalorder %s68, %s69
      %p81 = scmp.eq.s32.totalorder %s24, 3
      %p82 = por %p80, %p81
      %p84 = scmp.ne.s32.totalorder %s69, %s83
      %p85 = scmp.eq.s32.totalorder %s24, 0
      %p86 = por %p84, %p85
      %s88 = sadd.s32 %s87, 1
      %p91 = scmp.eq.s32.totalorder %s18, 3
      %p92 = scmp.ne.s32.totalorder %s87, %s89
      %p93 = scmp.eq.s32.totalorder %s18, 0
      %p94 = por %p92, %p93
      %p95 = scmp.ne.s32.totalorder %s87, %s89
      %p96 = scmp.eq.s32.totalorder %s23, 3
      %p97 = por %p95, %p96
      %p98 = scmp.ne.s32.totalorder %s89, %s90
      %p99 = scmp.eq.s32.totalorder %s23, 0
      %p100 = por %p98, %p99
      %p101 = scmp.ne.s32.totalorder %s89, %s90
      %p102 = scmp.eq.s32.totalorder %s24, 3
      %p103 = por %p101, %p102
      %p105 = scmp.ne.s32.totalorder %s90, %s104
      %p106 = scmp.eq.s32.totalorder %s24, 0
      %p107 = por %p105, %p106
      %s109 = sadd.s32 %s108, 1
      %p112 = scmp.eq.s32.totalorder %s18, 3
      %p113 = scmp.ne.s32.totalorder %s108, %s110
      %p114 = scmp.eq.s32.totalorder %s18, 0
      %p115 = por %p113, %p114
      %p116 = scmp.ne.s32.totalorder %s108, %s110
      %p117 = scmp.eq.s32.totalorder %s23, 3
      %p118 = por %p116, %p117
      %p119 = scmp.ne.s32.totalorder %s110, %s111
      %p120 = scmp.eq.s32.totalorder %s23, 0
      %p121 = por %p119, %p120
      %p122 = scmp.ne.s32.totalorder %s110, %s111
      %p123 = scmp.eq.s32.totalorder %s24, 3
      %p124 = por %p122, %p123
      %p126 = scmp.ne.s32.totalorder %s111, %s125
      %p127 = scmp.eq.s32.totalorder %s24, 0
      %p128 = por %p126, %p127
      %s130 = sadd.s32 %s129, 1
      %p133 = scmp.eq.s32.totalorder %s18, 3
      %p134 = scmp.ne.s32.totalorder %s129, %s131
      %p135 = scmp.eq.s32.totalorder %s18, 0
      %p136 = por %p134, %p135
      %p137 = scmp.ne.s32.totalorder %s129, %s131
      %p138 = scmp.eq.s32.totalorder %s23, 3
      %p139 = por %p137, %p138
      %p140 = scmp.ne.s32.totalorder %s131, %s132
      %p141 = scmp.eq.s32.totalorder %s23, 0
      %p142 = por %p140, %p141
      %p143 = scmp.ne.s32.totalorder %s131, %s132
      %p144 = scmp.eq.s32.totalorder %s24, 3
      %p145 = por %p143, %p144
      %p147 = scmp.ne.s32.totalorder %s132, %s146
      %p148 = scmp.eq.s32.totalorder %s24, 0
      %p149 = por %p147, %p148
      %s150 = ssub.s32 %s25, %s37
      %s151 = ssub.s32 %s26, %s33
      %s152 = sor.u32 %s150, %s151
      %p153 = scmp.eq.s32.totalorder %s152, 0
      %s155 = sadd.s32 %s154, 1
      %s156 = scalar_select %p153, %s154, %s155
      %p159 = pneg %p153
      %p160 = scmp.eq.s32.totalorder %s18, 3
      %p161 = por %p159, %p160
      %p162 = scmp.ne.s32.totalorder %s154, %s157
      %p163 = scmp.eq.s32.totalorder %s18, 0
      %p164 = por %p162, %p163
      %p165 = scmp.ne.s32.totalorder %s154, %s157
      %p166 = scmp.eq.s32.totalorder %s23, 3
      %p167 = por %p165, %p166
      %p168 = scmp.ne.s32.totalorder %s157, %s158
      %p169 = scmp.eq.s32.totalorder %s23, 0
      %p170 = por %p168, %p169
      %p171 = scmp.ne.s32.totalorder %s157, %s158
      %p172 = scmp.eq.s32.totalorder %s24, 3
      %p173 = por %p171, %p172
      %p175 = scmp.ne.s32.totalorder %s158, %s174
      %p176 = scmp.eq.s32.totalorder %s24, 0
      %p177 = por %p175, %p176
      %s178 = ssub.s32 %s25, %s37
      %s179 = ssub.s32 %s26, %s33
      %s180 = sor.u32 %s178, %s179
      %p181 = scmp.eq.s32.totalorder %s180, 0
      %s183 = sadd.s32 %s182, 1
      %s184 = scalar_select %p181, %s182, %s183
      %p187 = pneg %p181
      %p188 = scmp.eq.s32.totalorder %s18, 3
      %p189 = por %p187, %p188
      %p190 = scmp.ne.s32.totalorder %s182, %s185
      %p191 = scmp.eq.s32.totalorder %s18, 0
      %p192 = por %p190, %p191
      %p193 = scmp.ne.s32.totalorder %s182, %s185
      %p194 = scmp.eq.s32.totalorder %s23, 3
      %p195 = por %p193, %p194
      %p196 = scmp.ne.s32.totalorder %s185, %s186
      %p197 = scmp.eq.s32.totalorder %s23, 0
      %p198 = por %p196, %p197
      %p199 = scmp.ne.s32.totalorder %s185, %s186
      %p200 = scmp.eq.s32.totalorder %s24, 3
      %p201 = por %p199, %p200
      %p203 = scmp.ne.s32.totalorder %s186, %s202
      %p204 = scmp.eq.s32.totalorder %s24, 0
      %p205 = por %p203, %p204
      %s206 = ssub.s32 %s25, %s37
      %s207 = ssub.s32 %s26, %s33
      %s208 = sor.u32 %s206, %s207
      %p209 = scmp.eq.s32.totalorder %s208, 0
      %s211 = sadd.s32 %s210, 1
      %s212 = scalar_select %p209, %s210, %s211
      %p215 = pneg %p209
      %p216 = scmp.eq.s32.totalorder %s18, 3
      %p217 = por %p215, %p216
      %p218 = scmp.ne.s32.totalorder %s210, %s213
      %p219 = scmp.eq.s32.totalorder %s18, 0
      %p220 = por %p218, %p219
      %p221 = scmp.ne.s32.totalorder %s210, %s213
      %p222 = scmp.eq.s32.totalorder %s23, 3
      %p223 = por %p221, %p222
      %p224 = scmp.ne.s32.totalorder %s213, %s214
      %p225 = scmp.eq.s32.totalorder %s23, 0
      %p226 = por %p224, %p225
      %p227 = scmp.ne.s32.totalorder %s213, %s214
      %p228 = scmp.eq.s32.totalorder %s24, 3
      %p229 = por %p227, %p228
      %p231 = scmp.ne.s32.totalorder %s214, %s230
      %p232 = scmp.eq.s32.totalorder %s24, 0
      %p233 = por %p231, %p232
      %p234 = scmp.le.s32.totalorder 1, %s18
      %p235 = scmp.lt.s32.totalorder %s18, 5
      %p236 = pnand %p234, %p235
      %p237 = pneg %p236
      // Predicated region
      $region9: #{tpu_custom_call.1} parent=5 // pred_check
        _
      $region10: #{tpu_custom_call.1} parent=5 // pred_check_branch
        %239 = sbr.rel (%p236) target = $region12
      $region11: #{tpu_custom_call.1} parent=5 // pred_region
        %s240 = ssub.s32 %s18, 1
        // Predicated region
        $region13: #{tpu_custom_call.1} parent=11 // pred_check
          %p241 = pneg %p79
        $region14: #{tpu_custom_call.1} parent=11 // pred_check_branch
          %243 = sbr.rel (%p241) target = $region16
        $region15: #{tpu_custom_call.1} parent=11 // pred_region
          %245 = vsyncadd [#allocation5], 0
          %s247 = sshll.u32 %s1, 4
          %s248 = int_to_ptr.hbm [resolvable:$true] %s247
          %s249 = sshll.u32 [#allocation4], 4
          %s250 = int_to_ptr.vmem [resolvable:$true] %s249
          %252 = dma.hbm_to_vmem [thread:$0]  %s248, 16, %s250, [#allocation5]
        $region16: #{tpu_custom_call.1} parent=11 // pred_fallthru
          _
        // Predicated region
        $region17: #{tpu_custom_call.1} parent=11 // pred_check
          %p253 = pneg %p100
        $region18: #{tpu_custom_call.1} parent=11 // pred_check_branch
          %255 = sbr.rel (%p253) target = $region20
        $region19: #{tpu_custom_call.1} parent=11 // pred_region
          _
        $region20: #{tpu_custom_call.1} parent=11 // pred_fallthru
          _
        // Predicated region
        $region21: #{tpu_custom_call.1} parent=11 // pred_check
          %p256 = pneg %p121
        $region22: #{tpu_custom_call.1} parent=11 // pred_check_branch
          %258 = sbr.rel (%p256) target = $region24
        $region23: #{tpu_custom_call.1} parent=11 // pred_region
          %260 = vsyncadd [#allocation5], 0
          %s261 = sshll.u32 %s3, 4
          %s262 = int_to_ptr.hbm [resolvable:$true] %s261
          %s263 = sshll.u32 [#allocation6], 4
          %s264 = int_to_ptr.vmem [resolvable:$true] %s263
          %269 = dma.hbm_to_vmem [thread:$0]  %s262, 1024, %s264, [#allocation5], 128, 128, 8
        $region24: #{tpu_custom_call.1} parent=11 // pred_fallthru
          _
        // Predicated region
        $region25: #{tpu_custom_call.1} parent=11 // pred_check
          %p270 = pneg %p142
        $region26: #{tpu_custom_call.1} parent=11 // pred_check_branch
          %272 = sbr.rel (%p270) target = $region28
        $region27: #{tpu_custom_call.1} parent=11 // pred_region
          _
        $region28: #{tpu_custom_call.1} parent=11 // pred_fallthru
          _
      $region12: #{tpu_custom_call.1} parent=5 // pred_fallthru
        _
      %p273 = scmp.lt.s32.totalorder %s18, 4
      // Predicated region
      $region29: #{tpu_custom_call.1} parent=5 // pred_check
        %p274 = pneg %p273
      $region30: #{tpu_custom_call.1} parent=5 // pred_check_branch
        %276 = sbr.rel (%p274) target = $region32
      $region31: #{tpu_custom_call.1} parent=5 // pred_region
        // Predicated region
        $region33: #{tpu_custom_call.1} parent=31 // pred_check
          %p277 = pneg %p52
        $region34: #{tpu_custom_call.1} parent=31 // pred_check_branch
          %279 = sbr.rel (%p277) target = $region36
        $region35: #{tpu_custom_call.1} parent=31 // pred_region
          %s280 = sand.u32 %s42, 1
          %s281 = scalar_lea.sflag [#allocation3], %s280
          %s282 = sand.u32 %s42, 1
          %s283 = smul.addr %s282, 16
          %s284 = scalar_lea.vmem [#allocation2], %s283
          %s285 = smul.u32 2, %s26
          %287 = vsyncadd %s281, 0
          %s288 = smul.addr %s25, 4
          %s289 = sadd.s32 %s285, %s288
          %s290 = smul.addr %s289, 8
          %s291 = scalar_lea.hbm %s0, %s290
          %s292 = sshll.u32 %s291, 4
          %s293 = int_to_ptr.hbm [resolvable:$true] %s292
          %s294 = sshll.u32 %s284, 4
          %s295 = int_to_ptr.vmem [resolvable:$true] %s294
          %300 = dma.hbm_to_vmem [thread:$0]  %s293, 256, %s295, %s281, 128, 128, 8
        $region36: #{tpu_custom_call.1} parent=31 // pred_fallthru
          _
      $region32: #{tpu_custom_call.1} parent=5 // pred_fallthru
        _
      %p301 = scmp.le.s32.totalorder 1, %s18
      %p302 = scmp.lt.s32.totalorder %s18, 5
      %p303 = pnand %p301, %p302
      %p304 = pneg %p303
      // Predicated region
      $region37: #{tpu_custom_call.1} parent=5 // pred_check
        _
      $region38: #{tpu_custom_call.1} parent=5 // pred_check_branch
        %306 = sbr.rel (%p303) target = $region40
      $region39: #{tpu_custom_call.1} parent=5 // pred_region
        %s307 = ssub.s32 %s18, 1
        %s308 = sand.u32 %s45, 1
        %s309 = scalar_lea.sflag [#allocation3], %s308
        %s310 = sand.u32 %s45, 1
        %s311 = smul.addr %s310, 16
        %s312 = scalar_lea.vmem [#allocation2], %s311
        // Predicated region
        $region41: #{tpu_custom_call.1} parent=39 // pred_check
          %p313 = pneg %p58
        $region42: #{tpu_custom_call.1} parent=39 // pred_check_branch
          %315 = sbr.rel (%p313) target = $region44
        $region43: #{tpu_custom_call.1} parent=39 // pred_region
          %317 = dma.done %s309, 256
        $region44: #{tpu_custom_call.1} parent=39 // pred_fallthru
          _
        // Predicated region
        $region45: #{tpu_custom_call.1} parent=39 // pred_check
          %p318 = pneg %p79
        $region46: #{tpu_custom_call.1} parent=39 // pred_check_branch
          %320 = sbr.rel (%p318) target = $region48
        $region47: #{tpu_custom_call.1} parent=39 // pred_region
          %322 = dma.done [#allocation5], 16
        $region48: #{tpu_custom_call.1} parent=39 // pred_fallthru
          _
        // Predicated region
        $region49: #{tpu_custom_call.1} parent=39 // pred_check
          %p323 = pneg %p121
        $region50: #{tpu_custom_call.1} parent=39 // pred_check_branch
          %325 = sbr.rel (%p323) target = $region52
        $region51: #{tpu_custom_call.1} parent=39 // pred_region
          %327 = dma.done [#allocation5], 1024
        $region52: #{tpu_custom_call.1} parent=39 // pred_fallthru
          _
        %s328 = sand.u32 %s45, 1
        %s329 = scalar_lea.sflag [#allocation3], %s328
        %s330 = sand.u32 %s45, 1
        %s331 = smul.addr %s330, 16
        %s332 = scalar_lea.vmem [#allocation2], %s331
        %p333 = pneg %p58
        %p334 = pneg %p55
        %p335 = pneg %p79
        %p336 = pneg %p76
        %p337 = pneg %p100
        %p338 = pneg %p97
        %p339 = pneg %p121
        %p340 = pneg %p118
        %p341 = pneg %p142
        %p342 = pneg %p139
        %p343 = pneg %p170
        %p344 = pneg %p167
        %s345 = sand.u32 %s157, 1
        %s346 = sand.u32 %s157, 1
        %s347 = smul.addr %s346, 32
        %s348 = scalar_lea.vmem [#allocation7], %s347
        %p349 = pneg %p198
        %p350 = pneg %p195
        %s351 = sand.u32 %s185, 1
        %s352 = sand.u32 %s185, 1
        %s353 = smul.addr %s352, 32
        %s354 = scalar_lea.vmem [#allocation8], %s353
        %p355 = pneg %p226
        %p356 = pneg %p223
        %s357 = sand.u32 %s213, 1
        %s358 = sand.u32 %s213, 1
        %s359 = smul.addr %s358, 32
        %s360 = scalar_lea.vmem [#allocation9], %s359
        %s361 = smul.u32 2, %s28
        %s362 = smul.u32 2, %s28
        %s363 = smul.u32 2, %s28
        %s364 = smul.u32 2, %s28
        %v366 = vld [vmem:[%s312] sm:$0xff]
        %v367 = vld [vmem:[%s312 + $0x8] sm:$0xff]
        %v368 = vld [vmem:[#allocation4] sm:$0x1]
        %v369 = vld [vmem:[%s2] sm:$0x1]
        %vm370 = vcmask 523264
        %v371 = vsel %vm370, %v366, 0.0
        %372 = vadd.xlane.f32.xlu0 %v371
        %v373 = vpop.xlane.xlu0 %372
        %v374 = vsel %vm370, %v367, 0.0
        %375 = vadd.xlane.f32.xlu0 %v374
        %v376 = vpop.xlane.xlu0 %375
        %v377 = vrcp.pop 64.0
        %v378 = vmul.f32 64.0, %v377
        %v379 = vsub.f32 1.0, %v378
        %v380 = vmul.f32 %v377, %v379
        %v381 = vadd.f32 %v377, %v380
        %vm382 = vweird.f32 %v377
        %v383 = vsel %vm382, %v377, %v381
        %v384 = vmul.f32 %v373, %v383
        %v385 = vmul.f32 %v376, %v383
        %v386 = vsub.f32 %v366, %v384
        %v387 = vsub.f32 %v367, %v385
        %v388 = vmul.f32 %v386, %v386
        %v389 = vmul.f32 %v387, %v387
        %v390 = vsel %vm370, %v388, 0.0
        %391 = vadd.xlane.f32.xlu0 %v390
        %v392 = vpop.xlane.xlu0 %391
        %v393 = vsel %vm370, %v389, 0.0
        %394 = vadd.xlane.f32.xlu0 %v393
        %v395 = vpop.xlane.xlu0 %394
        %v396 = vmul.f32 %v392, %v383
        %v397 = vmul.f32 %v395, %v383
        %v398 = vadd.f32 %v396, 1e-05
        %v399 = vadd.f32 %v397, 1e-05
        %v400 = vrsqrt.pop %v398
        %v401 = vmul.f32 %v400, %v398
        %v402 = vmul.f32 %v401, %v400
        %v403 = vmul.f32 0.5, %v402
        %v404 = vsub.f32 1.5, %v403
        %v405 = vmul.f32 %v400, %v404
        %vm406 = vweird.f32 %v398
        %vm407 = vweird.f32 %v400
        %vm408 = vmor %vm406, %vm407
        %v409 = vsel %vm408, %v400, %v405
        %v410 = vrsqrt.pop %v399
        %v411 = vmul.f32 %v410, %v399
        %v412 = vmul.f32 %v411, %v410
        %v413 = vmul.f32 0.5, %v412
        %v414 = vsub.f32 1.5, %v413
        %v415 = vmul.f32 %v410, %v414
        %vm416 = vweird.f32 %v399
        %vm417 = vweird.f32 %v410
        %vm418 = vmor %vm416, %vm417
        %v419 = vsel %vm418, %v410, %v415
        %v420 = vmul.f32 %v386, %v409
        %v421 = vmul.f32 %v387, %v419
        %v423 = vperm.slane %v368, 0
        %v425 = vmul.f32 %v420, %v423
        %v426 = vmul.f32 %v421, %v423
        %v428 = vperm.slane %v369, 0
        %v430 = vadd.f32 %v425, %v428
        %v431 = vadd.f32 %v426, %v428
        %v432 = vpack.c.bf16 %v431, %v430
        %v433 = vld [vmem:[#allocation6] sm:$0xff]
        %v434 = vld [vmem:[#allocation6 + $0x8] sm:$0xff]
        %v435 = vld [vmem:[#allocation6 + $0x10] sm:$0xff]
        %v436 = vld [vmem:[#allocation6 + $0x18] sm:$0xff]
        %v437 = vld [vmem:[#allocation6 + $0x20] sm:$0xff]
        %v438 = vld [vmem:[#allocation6 + $0x28] sm:$0xff]
        %v439 = vld [vmem:[#allocation6 + $0x30] sm:$0xff]
        %v440 = vld [vmem:[#allocation6 + $0x38] sm:$0xff]
        %v441 = vld [vmem:[%s4] sm:$0x3]
        %v443 = vperm.slane %v441, 0
        %v444 = vperm.slane %v441, 1
        %v455 = vunpack.c.l.b16 %v433
        %v456 = vunpack.c.h.b16 %v433
        %v457 = vunpack.c.l.b16 %v434
        %v458 = vunpack.c.h.b16 %v434
        %v459 = vunpack.c.l.b16 %v435
        %v460 = vunpack.c.h.b16 %v435
        %v461 = vunpack.c.l.b16 %v436
        %v462 = vunpack.c.h.b16 %v436
        %v463 = vunpack.c.l.b16 %v437
        %v464 = vunpack.c.h.b16 %v437
        %v465 = vunpack.c.l.b16 %v438
        %v466 = vunpack.c.h.b16 %v438
        %v467 = vunpack.c.l.b16 %v439
        %v468 = vunpack.c.h.b16 %v439
        %v469 = vunpack.c.l.b16 %v440
        %v470 = vunpack.c.h.b16 %v440
        %v471 = vpack.c.b16 %v457, %v455
        %v472 = vpack.c.b16 %v458, %v456
        %v473 = vpack.c.b16 %v461, %v459
        %v474 = vpack.c.b16 %v462, %v460
        %v475 = vpack.c.b16 %v465, %v463
        %v476 = vpack.c.b16 %v466, %v464
        %v477 = vpack.c.b16 %v469, %v467
        %v478 = vpack.c.b16 %v470, %v468
        %v488 = vsel %vm370, %v432, 0
        %490 = vmatpush.bf16.msra.mxu0 0
        %491 = vmatpush.bf16.msra.mxu0 0
        %492 = vmatpush.bf16.msra.mxu0 0
        %493 = vmatpush.bf16.msra.mxu0 0
        %494 = vmatpush.bf16.msra.mxu0 %v477
        %495 = vmatpush.bf16.msra.mxu0 %v475
        %496 = vmatpush.bf16.msra.mxu0 %v473
        %497 = vmatpush.bf16.msra.mxu0 %v471
        %498 = vmatmul.bf16.gmra.mxu0 %v488
        %v499 = vpop.f32.mrf.mxu0
        %v500 = vadd.f32 %v443, %v499
        %v501 = vpop.f32.mrf.mxu0
        %v502 = vadd.f32 %v443, %v501
        %503 = vdwg.mxu0
        %504 = vmatpush.bf16.msra.mxu0 0
        %505 = vmatpush.bf16.msra.mxu0 0
        %506 = vmatpush.bf16.msra.mxu0 0
        %507 = vmatpush.bf16.msra.mxu0 0
        %508 = vmatpush.bf16.msra.mxu0 %v478
        %509 = vmatpush.bf16.msra.mxu0 %v476
        %510 = vmatpush.bf16.msra.mxu0 %v474
        %511 = vmatpush.bf16.msra.mxu0 %v472
        %512 = vmatmul.bf16.gmra.mxu0 %v488
        %v513 = vpop.f32.mrf.mxu0
        %v514 = vadd.f32 %v444, %v513
        %v515 = vpop.f32.mrf.mxu0
        %v516 = vadd.f32 %v444, %v515
        %517 = vdwg.mxu0
        %v518 = vmul.f32 %v500, 0.25
        %v519 = vmul.f32 %v502, 0.25
        %v520 = vpack.c.bf16 %v518, %v518
        %v521 = vpack.c.bf16 %v519, %v519
        %vm522 = vcmask 125952
        %523 = vst.msk [vmem:[%s348] sm:$0xf] %vm522, %v520
        %524 = vst.msk [vmem:[%s348 + $0x4] sm:$0xf] %vm522, %v521
        %v525 = vpack.c.bf16 %v500, %v500
        %v526 = vpack.c.bf16 %v502, %v502
        %529 = vrot.lane.b32.xlu0 %v525, 64
        %v530 = vpop.permute.xlu0 %529
        %531 = vrot.lane.b32.xlu0 %v526, 64
        %v532 = vpop.permute.xlu0 %531
        %535 = vst.msk [vmem:[%s354] sm:$0xf] %vm522, %v530
        %536 = vst.msk [vmem:[%s354 + $0x4] sm:$0xf] %vm522, %v532
        %v537 = vpack.c.bf16 %v514, %v514
        %v538 = vpack.c.bf16 %v516, %v516
        %539 = vst.msk [vmem:[%s360] sm:$0xf] %vm522, %v537
        %540 = vst.msk [vmem:[%s360 + $0x4] sm:$0xf] %vm522, %v538
        %543 = vrot.lane.b32.xlu0 %v520, 112
        %v544 = vpop.permute.xlu0 %543
        %545 = vrot.lane.b32.xlu0 %v521, 112
        %v546 = vpop.permute.xlu0 %545
        %s549 = scalar_lea.vmem %s348, 8 [#allocation7]
        %550 = vst.msk [vmem:[%s549] sm:$0xf] %vm522, %v544
        %551 = vst.msk [vmem:[%s549 + $0x4] sm:$0xf] %vm522, %v546
        %552 = vrot.lane.b32.xlu0 %v525, 48
        %v553 = vpop.permute.xlu0 %552
        %554 = vrot.lane.b32.xlu0 %v526, 48
        %v555 = vpop.permute.xlu0 %554
        %s558 = scalar_lea.vmem %s354, 8 [#allocation8]
        %559 = vst.msk [vmem:[%s558] sm:$0xf] %vm522, %v553
        %560 = vst.msk [vmem:[%s558 + $0x4] sm:$0xf] %vm522, %v555
        %563 = vrot.lane.b32.xlu0 %v537, 112
        %v564 = vpop.permute.xlu0 %563
        %565 = vrot.lane.b32.xlu0 %v538, 112
        %v566 = vpop.permute.xlu0 %565
        %s569 = scalar_lea.vmem %s360, 8 [#allocation9]
        %570 = vst.msk [vmem:[%s569] sm:$0xf] %vm522, %v564
        %571 = vst.msk [vmem:[%s569 + $0x4] sm:$0xf] %vm522, %v566
        %572 = vrot.lane.b32.xlu0 %v520, 96
        %v573 = vpop.permute.xlu0 %572
        %574 = vrot.lane.b32.xlu0 %v521, 96
        %v575 = vpop.permute.xlu0 %574
        %s578 = scalar_lea.vmem %s348, 16 [#allocation7]
        %579 = vst.msk [vmem:[%s578] sm:$0xf] %vm522, %v573
        %580 = vst.msk [vmem:[%s578 + $0x4] sm:$0xf] %vm522, %v575
        %581 = vrot.lane.b32.xlu0 %v525, 32
        %v582 = vpop.permute.xlu0 %581
        %583 = vrot.lane.b32.xlu0 %v526, 32
        %v584 = vpop.permute.xlu0 %583
        %s587 = scalar_lea.vmem %s354, 16 [#allocation8]
        %588 = vst.msk [vmem:[%s587] sm:$0xf] %vm522, %v582
        %589 = vst.msk [vmem:[%s587 + $0x4] sm:$0xf] %vm522, %v584
        %590 = vrot.lane.b32.xlu0 %v537, 96
        %v591 = vpop.permute.xlu0 %590
        %592 = vrot.lane.b32.xlu0 %v538, 96
        %v593 = vpop.permute.xlu0 %592
        %s596 = scalar_lea.vmem %s360, 16 [#allocation9]
        %597 = vst.msk [vmem:[%s596] sm:$0xf] %vm522, %v591
        %598 = vst.msk [vmem:[%s596 + $0x4] sm:$0xf] %vm522, %v593
        %599 = vrot.lane.b32.xlu0 %v520, 80
        %v600 = vpop.permute.xlu0 %599
        %601 = vrot.lane.b32.xlu0 %v521, 80
        %v602 = vpop.permute.xlu0 %601
        %s605 = scalar_lea.vmem %s348, 24 [#allocation7]
        %606 = vst.msk [vmem:[%s605] sm:$0xf] %vm522, %v600
        %607 = vst.msk [vmem:[%s605 + $0x4] sm:$0xf] %vm522, %v602
        %608 = vrot.lane.b32.xlu0 %v525, 16
        %v609 = vpop.permute.xlu0 %608
        %610 = vrot.lane.b32.xlu0 %v526, 16
        %v611 = vpop.permute.xlu0 %610
        %s614 = scalar_lea.vmem %s354, 24 [#allocation8]
        %615 = vst.msk [vmem:[%s614] sm:$0xf] %vm522, %v609
        %616 = vst.msk [vmem:[%s614 + $0x4] sm:$0xf] %vm522, %v611
        %617 = vrot.lane.b32.xlu0 %v537, 80
        %v618 = vpop.permute.xlu0 %617
        %619 = vrot.lane.b32.xlu0 %v538, 80
        %v620 = vpop.permute.xlu0 %619
        %s623 = scalar_lea.vmem %s360, 24 [#allocation9]
        %624 = vst.msk [vmem:[%s623] sm:$0xf] %vm522, %v618
        %625 = vst.msk [vmem:[%s623 + $0x4] sm:$0xf] %vm522, %v620
        %s626 = sand.u32 %s157, 1
        %s627 = sand.u32 %s157, 1
        %s628 = smul.addr %s627, 32
        %s629 = scalar_lea.vmem [#allocation7], %s628
        %s630 = sand.u32 %s185, 1
        %s631 = sand.u32 %s185, 1
        %s632 = smul.addr %s631, 32
        %s633 = scalar_lea.vmem [#allocation8], %s632
        %s634 = sand.u32 %s213, 1
        %s635 = sand.u32 %s213, 1
        %s636 = smul.addr %s635, 32
        %s637 = scalar_lea.vmem [#allocation9], %s636
        // Predicated region
        $region53: #{tpu_custom_call.1} parent=39 // pred_check
          %p638 = pneg %p167
        $region54: #{tpu_custom_call.1} parent=39 // pred_check_branch
          %640 = sbr.rel (%p638) target = $region56
        $region55: #{tpu_custom_call.1} parent=39 // pred_region
          %s641 = smul.u32 2, %s28
          %s642 = smul.addr %s27, 16
          %s643 = sadd.s32 %s641, %s642
          %s644 = smul.addr %s643, 4
          %s645 = scalar_lea.vmem %s5, %s644
          // Predicated region
          $region57: #{tpu_custom_call.1} parent=55 // pred_check
            _
          $region58: #{tpu_custom_call.1} parent=55 // pred_check_branch
            %647 = sbr.rel (0) target = $region60
          $region59: #{tpu_custom_call.1} parent=55 // pred_region
            // Predicated region
            $region61: #{tpu_custom_call.1} parent=59 // pred_check
              _
            $region62: #{tpu_custom_call.1} parent=59 // pred_check_branch
              %649 = sbr.rel target = $region64
            $region63: #{tpu_custom_call.1} parent=59 // pred_region
              // Predicated region
              $region76: #{tpu_custom_call.1} parent=63 // pred_check
                _
              $region77: #{tpu_custom_call.1} parent=63 // pred_check_branch
                %679 = sbr.rel (0) target = $region79
              $region78: #{tpu_custom_call.1} parent=63 // pred_region
                loop: start=0, step=1, limit=1
                $region80: #{tpu_custom_call.1} parent=78 // loop_pre_header
                  _
                $region81: #{tpu_custom_call.1} parent=78 // loop_header
                  %s681 = sphi 0, %s685
                  %p682 = scmp.ge.s32.totalorder %s681, 1
                  %s686 = sphi %s629, %s629
                  %s687 = sphi %s645, %s645
                $region82: #{tpu_custom_call.1} parent=78 // loop_header_branch
                  %684 = sbr.rel (%p682) target = $region86
                $region83: #{tpu_custom_call.1} parent=78 // loop_body
                  _
                $region84: #{tpu_custom_call.1} parent=78 // loop_footer
                  %s685 = sadd.s32 1, %s681
                $region85: #{tpu_custom_call.1} parent=78 // loop_footer_branch
                  %680 = sbr.rel target = $region81
                $region86: #{tpu_custom_call.1} parent=78 // loop_exit
                  _
                %s689 = ssub.s32 16, 1
                loop: start=0, step=1, limit=1
                $region87: #{tpu_custom_call.1} parent=78 // loop_pre_header
                  _
                $region88: #{tpu_custom_call.1} parent=78 // loop_header
                  %s691 = sphi 0, %s695
                  %p692 = scmp.ge.s32.totalorder %s691, 1
                  %s696 = sphi %s629, %s629
                  %s697 = sphi %s645, %s645
                $region89: #{tpu_custom_call.1} parent=78 // loop_header_branch
                  %694 = sbr.rel (%p692) target = $region93
                $region90: #{tpu_custom_call.1} parent=78 // loop_body
                  %v698 = vld [vmem:[%s696] sm:%s689]
                  %699 = vst [vmem:[%s697] sm:%s689] %v698
                  %v700 = vld [vmem:[%s696 + $0x4] sm:%s689]
                  %701 = vst [vmem:[%s697 + $0x4] sm:%s689] %v700
                  %v702 = vld [vmem:[%s696 + $0x8] sm:%s689]
                  %703 = vst [vmem:[%s697 + $0x10] sm:%s689] %v702
                  %v704 = vld [vmem:[%s696 + $0xc] sm:%s689]
                  %705 = vst [vmem:[%s697 + $0x14] sm:%s689] %v704
                  %v706 = vld [vmem:[%s696 + $0x10] sm:%s689]
                  %707 = vst [vmem:[%s697 + $0x20] sm:%s689] %v706
                  %v708 = vld [vmem:[%s696 + $0x14] sm:%s689]
                  %709 = vst [vmem:[%s697 + $0x24] sm:%s689] %v708
                  %v710 = vld [vmem:[%s696 + $0x18] sm:%s689]
                  %711 = vst [vmem:[%s697 + $0x30] sm:%s689] %v710
                  %v712 = vld [vmem:[%s696 + $0x1c] sm:%s689]
                  %713 = vst [vmem:[%s697 + $0x34] sm:%s689] %v712
                $region91: #{tpu_custom_call.1} parent=78 // loop_footer
                  %s695 = sadd.s32 1, %s691
                $region92: #{tpu_custom_call.1} parent=78 // loop_footer_branch
                  %690 = sbr.rel target = $region88
                $region93: #{tpu_custom_call.1} parent=78 // loop_exit
                  _
              $region79: #{tpu_custom_call.1} parent=63 // pred_fallthru
                _
            $region64: #{tpu_custom_call.1} parent=59 // pred_fallthru
              _
            // Predicated region
            $region65: #{tpu_custom_call.1} parent=59 // pred_check
              _
            $region66: #{tpu_custom_call.1} parent=59 // pred_check_branch
              %651 = sbr.rel (0) target = $region68
            $region67: #{tpu_custom_call.1} parent=59 // pred_region
              %s653 = ssub.s32 16, 1
              loop: start=0, step=1, limit=1
              $region69: #{tpu_custom_call.1} parent=67 // loop_pre_header
                _
              $region70: #{tpu_custom_call.1} parent=67 // loop_header
                %s655 = sphi 0, %s659
                %p656 = scmp.ge.s32.totalorder %s655, 1
                %s660 = sphi %s629, %s629
                %s661 = sphi %s645, %s645
              $region71: #{tpu_custom_call.1} parent=67 // loop_header_branch
                %658 = sbr.rel (%p656) target = $region75
              $region72: #{tpu_custom_call.1} parent=67 // loop_body
                %v662 = vld [vmem:[%s660] sm:%s653]
                %663 = vst [vmem:[%s661] sm:%s653] %v662
                %v664 = vld [vmem:[%s660 + $0x4] sm:%s653]
                %665 = vst [vmem:[%s661 + $0x4] sm:%s653] %v664
                %v666 = vld [vmem:[%s660 + $0x8] sm:%s653]
                %667 = vst [vmem:[%s661 + $0x10] sm:%s653] %v666
                %v668 = vld [vmem:[%s660 + $0xc] sm:%s653]
                %669 = vst [vmem:[%s661 + $0x14] sm:%s653] %v668
                %v670 = vld [vmem:[%s660 + $0x10] sm:%s653]
                %671 = vst [vmem:[%s661 + $0x20] sm:%s653] %v670
                %v672 = vld [vmem:[%s660 + $0x14] sm:%s653]
                %673 = vst [vmem:[%s661 + $0x24] sm:%s653] %v672
                %v674 = vld [vmem:[%s660 + $0x18] sm:%s653]
                %675 = vst [vmem:[%s661 + $0x30] sm:%s653] %v674
                %v676 = vld [vmem:[%s660 + $0x1c] sm:%s653]
                %677 = vst [vmem:[%s661 + $0x34] sm:%s653] %v676
              $region73: #{tpu_custom_call.1} parent=67 // loop_footer
                %s659 = sadd.s32 1, %s655
              $region74: #{tpu_custom_call.1} parent=67 // loop_footer_branch
                %654 = sbr.rel target = $region70
              $region75: #{tpu_custom_call.1} parent=67 // loop_exit
                _
            $region68: #{tpu_custom_call.1} parent=59 // pred_fallthru
              _
          $region60: #{tpu_custom_call.1} parent=55 // pred_fallthru
            _
          %714 = vnop
        $region56: #{tpu_custom_call.1} parent=39 // pred_fallthru
          _
        // Predicated region
        $region94: #{tpu_custom_call.1} parent=39 // pred_check
          %p715 = pneg %p195
        $region95: #{tpu_custom_call.1} parent=39 // pred_check_branch
          %717 = sbr.rel (%p715) target = $region97
        $region96: #{tpu_custom_call.1} parent=39 // pred_region
          %s718 = smul.u32 2, %s28
          %s719 = smul.addr %s27, 16
          %s720 = sadd.s32 %s718, %s719
          %s721 = smul.addr %s720, 4
          %s722 = scalar_lea.vmem %s6, %s721
          // Predicated region
          $region98: #{tpu_custom_call.1} parent=96 // pred_check
            _
          $region99: #{tpu_custom_call.1} parent=96 // pred_check_branch
            %724 = sbr.rel (0) target = $region101
          $region100: #{tpu_custom_call.1} parent=96 // pred_region
            // Predicated region
            $region102: #{tpu_custom_call.1} parent=100 // pred_check
              _
            $region103: #{tpu_custom_call.1} parent=100 // pred_check_branch
              %726 = sbr.rel target = $region105
            $region104: #{tpu_custom_call.1} parent=100 // pred_region
              // Predicated region
              $region117: #{tpu_custom_call.1} parent=104 // pred_check
                _
              $region118: #{tpu_custom_call.1} parent=104 // pred_check_branch
                %756 = sbr.rel (0) target = $region120
              $region119: #{tpu_custom_call.1} parent=104 // pred_region
                loop: start=0, step=1, limit=1
                $region121: #{tpu_custom_call.1} parent=119 // loop_pre_header
                  _
                $region122: #{tpu_custom_call.1} parent=119 // loop_header
                  %s758 = sphi 0, %s762
                  %p759 = scmp.ge.s32.totalorder %s758, 1
                  %s763 = sphi %s633, %s633
                  %s764 = sphi %s722, %s722
                $region123: #{tpu_custom_call.1} parent=119 // loop_header_branch
                  %761 = sbr.rel (%p759) target = $region127
                $region124: #{tpu_custom_call.1} parent=119 // loop_body
                  _
                $region125: #{tpu_custom_call.1} parent=119 // loop_footer
                  %s762 = sadd.s32 1, %s758
                $region126: #{tpu_custom_call.1} parent=119 // loop_footer_branch
                  %757 = sbr.rel target = $region122
                $region127: #{tpu_custom_call.1} parent=119 // loop_exit
                  _
                %s766 = ssub.s32 16, 1
                loop: start=0, step=1, limit=1
                $region128: #{tpu_custom_call.1} parent=119 // loop_pre_header
                  _
                $region129: #{tpu_custom_call.1} parent=119 // loop_header
                  %s768 = sphi 0, %s772
                  %p769 = scmp.ge.s32.totalorder %s768, 1
                  %s773 = sphi %s633, %s633
                  %s774 = sphi %s722, %s722
                $region130: #{tpu_custom_call.1} parent=119 // loop_header_branch
                  %771 = sbr.rel (%p769) target = $region134
                $region131: #{tpu_custom_call.1} parent=119 // loop_body
                  %v775 = vld [vmem:[%s773] sm:%s766]
                  %776 = vst [vmem:[%s774] sm:%s766] %v775
                  %v777 = vld [vmem:[%s773 + $0x4] sm:%s766]
                  %778 = vst [vmem:[%s774 + $0x4] sm:%s766] %v777
                  %v779 = vld [vmem:[%s773 + $0x8] sm:%s766]
                  %780 = vst [vmem:[%s774 + $0x10] sm:%s766] %v779
                  %v781 = vld [vmem:[%s773 + $0xc] sm:%s766]
                  %782 = vst [vmem:[%s774 + $0x14] sm:%s766] %v781
                  %v783 = vld [vmem:[%s773 + $0x10] sm:%s766]
                  %784 = vst [vmem:[%s774 + $0x20] sm:%s766] %v783
                  %v785 = vld [vmem:[%s773 + $0x14] sm:%s766]
                  %786 = vst [vmem:[%s774 + $0x24] sm:%s766] %v785
                  %v787 = vld [vmem:[%s773 + $0x18] sm:%s766]
                  %788 = vst [vmem:[%s774 + $0x30] sm:%s766] %v787
                  %v789 = vld [vmem:[%s773 + $0x1c] sm:%s766]
                  %790 = vst [vmem:[%s774 + $0x34] sm:%s766] %v789
                $region132: #{tpu_custom_call.1} parent=119 // loop_footer
                  %s772 = sadd.s32 1, %s768
                $region133: #{tpu_custom_call.1} parent=119 // loop_footer_branch
                  %767 = sbr.rel target = $region129
                $region134: #{tpu_custom_call.1} parent=119 // loop_exit
                  _
              $region120: #{tpu_custom_call.1} parent=104 // pred_fallthru
                _
            $region105: #{tpu_custom_call.1} parent=100 // pred_fallthru
              _
            // Predicated region
            $region106: #{tpu_custom_call.1} parent=100 // pred_check
              _
            $region107: #{tpu_custom_call.1} parent=100 // pred_check_branch
              %728 = sbr.rel (0) target = $region109
            $region108: #{tpu_custom_call.1} parent=100 // pred_region
              %s730 = ssub.s32 16, 1
              loop: start=0, step=1, limit=1
              $region110: #{tpu_custom_call.1} parent=108 // loop_pre_header
                _
              $region111: #{tpu_custom_call.1} parent=108 // loop_header
                %s732 = sphi 0, %s736
                %p733 = scmp.ge.s32.totalorder %s732, 1
                %s737 = sphi %s633, %s633
                %s738 = sphi %s722, %s722
              $region112: #{tpu_custom_call.1} parent=108 // loop_header_branch
                %735 = sbr.rel (%p733) target = $region116
              $region113: #{tpu_custom_call.1} parent=108 // loop_body
                %v739 = vld [vmem:[%s737] sm:%s730]
                %740 = vst [vmem:[%s738] sm:%s730] %v739
                %v741 = vld [vmem:[%s737 + $0x4] sm:%s730]
                %742 = vst [vmem:[%s738 + $0x4] sm:%s730] %v741
                %v743 = vld [vmem:[%s737 + $0x8] sm:%s730]
                %744 = vst [vmem:[%s738 + $0x10] sm:%s730] %v743
                %v745 = vld [vmem:[%s737 + $0xc] sm:%s730]
                %746 = vst [vmem:[%s738 + $0x14] sm:%s730] %v745
                %v747 = vld [vmem:[%s737 + $0x10] sm:%s730]
                %748 = vst [vmem:[%s738 + $0x20] sm:%s730] %v747
                %v749 = vld [vmem:[%s737 + $0x14] sm:%s730]
                %750 = vst [vmem:[%s738 + $0x24] sm:%s730] %v749
                %v751 = vld [vmem:[%s737 + $0x18] sm:%s730]
                %752 = vst [vmem:[%s738 + $0x30] sm:%s730] %v751
                %v753 = vld [vmem:[%s737 + $0x1c] sm:%s730]
                %754 = vst [vmem:[%s738 + $0x34] sm:%s730] %v753
              $region114: #{tpu_custom_call.1} parent=108 // loop_footer
                %s736 = sadd.s32 1, %s732
              $region115: #{tpu_custom_call.1} parent=108 // loop_footer_branch
                %731 = sbr.rel target = $region111
              $region116: #{tpu_custom_call.1} parent=108 // loop_exit
                _
            $region109: #{tpu_custom_call.1} parent=100 // pred_fallthru
              _
          $region101: #{tpu_custom_call.1} parent=96 // pred_fallthru
            _
          %791 = vnop
        $region97: #{tpu_custom_call.1} parent=39 // pred_fallthru
          _
        // Predicated region
        $region135: #{tpu_custom_call.1} parent=39 // pred_check
          %p792 = pneg %p223
        $region136: #{tpu_custom_call.1} parent=39 // pred_check_branch
          %794 = sbr.rel (%p792) target = $region138
        $region137: #{tpu_custom_call.1} parent=39 // pred_region
          %s795 = smul.u32 2, %s28
          %s796 = smul.addr %s27, 16
          %s797 = sadd.s32 %s795, %s796
          %s798 = smul.addr %s797, 4
          %s799 = scalar_lea.vmem %s7, %s798
          // Predicated region
          $region139: #{tpu_custom_call.1} parent=137 // pred_check
            _
          $region140: #{tpu_custom_call.1} parent=137 // pred_check_branch
            %801 = sbr.rel (0) target = $region142
          $region141: #{tpu_custom_call.1} parent=137 // pred_region
            // Predicated region
            $region143: #{tpu_custom_call.1} parent=141 // pred_check
              _
            $region144: #{tpu_custom_call.1} parent=141 // pred_check_branch
              %803 = sbr.rel target = $region146
            $region145: #{tpu_custom_call.1} parent=141 // pred_region
              // Predicated region
              $region158: #{tpu_custom_call.1} parent=145 // pred_check
                _
              $region159: #{tpu_custom_call.1} parent=145 // pred_check_branch
                %833 = sbr.rel (0) target = $region161
              $region160: #{tpu_custom_call.1} parent=145 // pred_region
                loop: start=0, step=1, limit=1
                $region162: #{tpu_custom_call.1} parent=160 // loop_pre_header
                  _
                $region163: #{tpu_custom_call.1} parent=160 // loop_header
                  %s835 = sphi 0, %s839
                  %p836 = scmp.ge.s32.totalorder %s835, 1
                  %s840 = sphi %s637, %s637
                  %s841 = sphi %s799, %s799
                $region164: #{tpu_custom_call.1} parent=160 // loop_header_branch
                  %838 = sbr.rel (%p836) target = $region168
                $region165: #{tpu_custom_call.1} parent=160 // loop_body
                  _
                $region166: #{tpu_custom_call.1} parent=160 // loop_footer
                  %s839 = sadd.s32 1, %s835
                $region167: #{tpu_custom_call.1} parent=160 // loop_footer_branch
                  %834 = sbr.rel target = $region163
                $region168: #{tpu_custom_call.1} parent=160 // loop_exit
                  _
                %s843 = ssub.s32 16, 1
                loop: start=0, step=1, limit=1
                $region169: #{tpu_custom_call.1} parent=160 // loop_pre_header
                  _
                $region170: #{tpu_custom_call.1} parent=160 // loop_header
                  %s845 = sphi 0, %s849
                  %p846 = scmp.ge.s32.totalorder %s845, 1
                  %s850 = sphi %s637, %s637
                  %s851 = sphi %s799, %s799
                $region171: #{tpu_custom_call.1} parent=160 // loop_header_branch
                  %848 = sbr.rel (%p846) target = $region175
                $region172: #{tpu_custom_call.1} parent=160 // loop_body
                  %v852 = vld [vmem:[%s850] sm:%s843]
                  %853 = vst [vmem:[%s851] sm:%s843] %v852
                  %v854 = vld [vmem:[%s850 + $0x4] sm:%s843]
                  %855 = vst [vmem:[%s851 + $0x4] sm:%s843] %v854
                  %v856 = vld [vmem:[%s850 + $0x8] sm:%s843]
                  %857 = vst [vmem:[%s851 + $0x10] sm:%s843] %v856
                  %v858 = vld [vmem:[%s850 + $0xc] sm:%s843]
                  %859 = vst [vmem:[%s851 + $0x14] sm:%s843] %v858
                  %v860 = vld [vmem:[%s850 + $0x10] sm:%s843]
                  %861 = vst [vmem:[%s851 + $0x20] sm:%s843] %v860
                  %v862 = vld [vmem:[%s850 + $0x14] sm:%s843]
                  %863 = vst [vmem:[%s851 + $0x24] sm:%s843] %v862
                  %v864 = vld [vmem:[%s850 + $0x18] sm:%s843]
                  %865 = vst [vmem:[%s851 + $0x30] sm:%s843] %v864
                  %v866 = vld [vmem:[%s850 + $0x1c] sm:%s843]
                  %867 = vst [vmem:[%s851 + $0x34] sm:%s843] %v866
                $region173: #{tpu_custom_call.1} parent=160 // loop_footer
                  %s849 = sadd.s32 1, %s845
                $region174: #{tpu_custom_call.1} parent=160 // loop_footer_branch
                  %844 = sbr.rel target = $region170
                $region175: #{tpu_custom_call.1} parent=160 // loop_exit
                  _
              $region161: #{tpu_custom_call.1} parent=145 // pred_fallthru
                _
            $region146: #{tpu_custom_call.1} parent=141 // pred_fallthru
              _
            // Predicated region
            $region147: #{tpu_custom_call.1} parent=141 // pred_check
              _
            $region148: #{tpu_custom_call.1} parent=141 // pred_check_branch
              %805 = sbr.rel (0) target = $region150
            $region149: #{tpu_custom_call.1} parent=141 // pred_region
              %s807 = ssub.s32 16, 1
              loop: start=0, step=1, limit=1
              $region151: #{tpu_custom_call.1} parent=149 // loop_pre_header
                _
              $region152: #{tpu_custom_call.1} parent=149 // loop_header
                %s809 = sphi 0, %s813
                %p810 = scmp.ge.s32.totalorder %s809, 1
                %s814 = sphi %s637, %s637
                %s815 = sphi %s799, %s799
              $region153: #{tpu_custom_call.1} parent=149 // loop_header_branch
                %812 = sbr.rel (%p810) target = $region157
              $region154: #{tpu_custom_call.1} parent=149 // loop_body
                %v816 = vld [vmem:[%s814] sm:%s807]
                %817 = vst [vmem:[%s815] sm:%s807] %v816
                %v818 = vld [vmem:[%s814 + $0x4] sm:%s807]
                %819 = vst [vmem:[%s815 + $0x4] sm:%s807] %v818
                %v820 = vld [vmem:[%s814 + $0x8] sm:%s807]
                %821 = vst [vmem:[%s815 + $0x10] sm:%s807] %v820
                %v822 = vld [vmem:[%s814 + $0xc] sm:%s807]
                %823 = vst [vmem:[%s815 + $0x14] sm:%s807] %v822
                %v824 = vld [vmem:[%s814 + $0x10] sm:%s807]
                %825 = vst [vmem:[%s815 + $0x20] sm:%s807] %v824
                %v826 = vld [vmem:[%s814 + $0x14] sm:%s807]
                %827 = vst [vmem:[%s815 + $0x24] sm:%s807] %v826
                %v828 = vld [vmem:[%s814 + $0x18] sm:%s807]
                %829 = vst [vmem:[%s815 + $0x30] sm:%s807] %v828
                %v830 = vld [vmem:[%s814 + $0x1c] sm:%s807]
                %831 = vst [vmem:[%s815 + $0x34] sm:%s807] %v830
              $region155: #{tpu_custom_call.1} parent=149 // loop_footer
                %s813 = sadd.s32 1, %s809
              $region156: #{tpu_custom_call.1} parent=149 // loop_footer_branch
                %808 = sbr.rel target = $region152
              $region157: #{tpu_custom_call.1} parent=149 // loop_exit
                _
            $region150: #{tpu_custom_call.1} parent=141 // pred_fallthru
              _
          $region142: #{tpu_custom_call.1} parent=137 // pred_fallthru
            _
          %868 = vnop
        $region138: #{tpu_custom_call.1} parent=39 // pred_fallthru
          _
      $region40: #{tpu_custom_call.1} parent=5 // pred_fallthru
        _
      %p869 = scmp.le.s32.totalorder 2, %s18
      // Predicated region
      $region176: #{tpu_custom_call.1} parent=5 // pred_check
        %p870 = pneg %p869
      $region177: #{tpu_custom_call.1} parent=5 // pred_check_branch
        %872 = sbr.rel (%p870) target = $region179
      $region178: #{tpu_custom_call.1} parent=5 // pred_region
        %s873 = ssub.s32 %s18, 2
        // Predicated region
        $region180: #{tpu_custom_call.1} parent=178 // pred_check
          %p874 = pneg %p173
        $region181: #{tpu_custom_call.1} parent=178 // pred_check_branch
          %876 = sbr.rel (%p874) target = $region183
        $region182: #{tpu_custom_call.1} parent=178 // pred_region
          %s877 = sand.u32 %s158, 1
          %s878 = sand.u32 %s158, 1
          %s879 = smul.addr %s878, 32
          %s880 = scalar_lea.vmem [#allocation7], %s879
        $region183: #{tpu_custom_call.1} parent=178 // pred_fallthru
          _
        // Predicated region
        $region184: #{tpu_custom_call.1} parent=178 // pred_check
          %p881 = pneg %p201
        $region185: #{tpu_custom_call.1} parent=178 // pred_check_branch
          %883 = sbr.rel (%p881) target = $region187
        $region186: #{tpu_custom_call.1} parent=178 // pred_region
          %s884 = sand.u32 %s186, 1
          %s885 = sand.u32 %s186, 1
          %s886 = smul.addr %s885, 32
          %s887 = scalar_lea.vmem [#allocation8], %s886
        $region187: #{tpu_custom_call.1} parent=178 // pred_fallthru
          _
        // Predicated region
        $region188: #{tpu_custom_call.1} parent=178 // pred_check
          %p888 = pneg %p229
        $region189: #{tpu_custom_call.1} parent=178 // pred_check_branch
          %890 = sbr.rel (%p888) target = $region191
        $region190: #{tpu_custom_call.1} parent=178 // pred_region
          %s891 = sand.u32 %s214, 1
          %s892 = sand.u32 %s214, 1
          %s893 = smul.addr %s892, 32
          %s894 = scalar_lea.vmem [#allocation9], %s893
        $region191: #{tpu_custom_call.1} parent=178 // pred_fallthru
          _
      $region179: #{tpu_custom_call.1} parent=5 // pred_fallthru
        _
    $region6: #{tpu_custom_call.1} parent=1 // loop_footer
      %s22 = sadd.s32 1, %s18
    $region7: #{tpu_custom_call.1} parent=1 // loop_footer_branch
      %17 = sbr.rel target = $region3
    $region8: #{tpu_custom_call.1} parent=1 // loop_exit
      _
    %895 = vsyncpa [#allocation3], 1
    %s896 = scalar_lea.sflag [#allocation3], 1
    %897 = vsyncpa %s896, 1
    %898 = vsyncpa [#allocation5], 1

// kernel: tpu_custom_call.1
$region0: #{tpu_custom_call.1}
  #allocation0 [shape = 'u32[]', space=smem, size = 0x4, offset = 0x4, fixed_abs, tag = 'smem constant byte address 0x4 - core index']
  #allocation1 [shape = 'u32[72,128]{1,0:T(1,128)}', space=vmem, size = 0x9000, scoped, tag = 'internal scratch']
  %s0 = inlined_call_operand.hbm [shape: f32[2,32,64], index: 0, kind: input, shape index: {}]
  %s1 = inlined_call_operand.hbm [shape: f32[1,64], index: 1, kind: input, shape index: {}]
  %s2 = inlined_call_operand.vmem [shape: f32[1,64], index: 2, kind: input, shape index: {}]
  %s3 = inlined_call_operand.hbm [shape: bf16[64,192], index: 3, kind: input, shape index: {}]
  %s4 = inlined_call_operand.vmem [shape: f32[1,192], index: 4, kind: input, shape index: {}]
  %s5 = inlined_call_operand.vmem [shape: bf16[2,4,32,16], index: 5, kind: output, shape index: {0}]
  %s6 = inlined_call_operand.vmem [shape: bf16[2,4,32,16], index: 6, kind: output, shape index: {1}]
  %s7 = inlined_call_operand.vmem [shape: bf16[2,4,32,16], index: 7, kind: output, shape index: {2}]
  %8 = xla_tuple %s5, %s6, %s7
  %s9 = sld [smem:[#allocation0]]
  $region192: #{tpu_custom_call.1} parent=0
    _
  %s11 = ssub.s32 1, %s9
  %s12 = scalar_select 0, %s11, %s9
  $region1: #{tpu_custom_call.1} parent=0
    #allocation2 [shape = 'u8[16384]{0}', space=vmem, size = 0x4000, scoped, tag = 'input window, operand 0']
    #allocation3 [shape = 's32[2]{0}', space=sflag, size = 0x8, scoped, tag = 'scoped memory for tpu_custom_call.1']
    #allocation4 [shape = 'u8[512]{0}', space=vmem, size = 0x400, scoped, tag = 'input window, operand 1, single buffered']
    #allocation5 [shape = 's32[1]{0}', space=sflag, size = 0x4, scoped, tag = 'scoped memory for tpu_custom_call.1']
    #allocation6 [shape = 'u8[32768]{0}', space=vmem, size = 0x8000, scoped, tag = 'input window, operand 3, single buffered']
    #allocation7 [shape = 'u8[32768]{0}', space=vmem, size = 0x8000, scoped, tag = 'output window, operand 0']
    #allocation8 [shape = 'u8[32768]{0}', space=vmem, size = 0x8000, scoped, tag = 'output window, operand 1']
    #allocation9 [shape = 'u8[32768]{0}', space=vmem, size = 0x8000, scoped, tag = 'output window, operand 2']
    %13 = vsyncpa [#allocation3], 0
    %s14 = scalar_lea.sflag [#allocation3], 1
    %15 = vsyncpa %s14, 0
    %16 = vsyncpa [#allocation5], 0
    loop: start=0, step=1, limit=6
    $region2: #{tpu_custom_call.1} parent=1 // loop_pre_header
      _
    $region3: #{tpu_custom_call.1} parent=1 // loop_header
      %s18 = sphi 0, %s22
      %p19 = scmp.ge.s32.totalorder %s18, 6
      %s25 = sphi 0, %s37
      %s26 = sphi 0, %s33
      %s27 = sphi 0, %s25
      %s28 = sphi 0, %s26
      %s29 = sphi 0, %s27
      %s30 = sphi 0, %s28
      %s42 = sphi 0, %s44
      %s45 = sphi 0, %s42
      %s46 = sphi 0, %s45
      %s62 = sphi 0, %s46
      %s66 = sphi 0, %s66
      %s68 = sphi 0, %s66
      %s69 = sphi 0, %s68
      %s83 = sphi 0, %s69
      %s87 = sphi 0, %s87
      %s89 = sphi 0, %s87
      %s90 = sphi 0, %s89
      %s104 = sphi 0, %s90
      %s108 = sphi 0, %s108
      %s110 = sphi 0, %s108
      %s111 = sphi 0, %s110
      %s125 = sphi 0, %s111
      %s129 = sphi 0, %s129
      %s131 = sphi 0, %s129
      %s132 = sphi 0, %s131
      %s146 = sphi 0, %s132
      %s154 = sphi 0, %s156
      %s157 = sphi 0, %s154
      %s158 = sphi 0, %s157
      %s174 = sphi 0, %s158
      %s182 = sphi 0, %s184
      %s185 = sphi 0, %s182
      %s186 = sphi 0, %s185
      %s202 = sphi 0, %s186
      %s210 = sphi 0, %s212
      %s213 = sphi 0, %s210
      %s214 = sphi 0, %s213
      %s230 = sphi 0, %s214
    $region4: #{tpu_custom_call.1} parent=1 // loop_header_branch
      %21 = sbr.rel (%p19) target = $region8
    $region5: #{tpu_custom_call.1} parent=1 // loop_body
      %s23 = ssub.s32 %s18, 1
      %s24 = ssub.s32 %s18, 2
      %s31 = sadd.s32 1, %s26
      %p32 = scmp.ge.s32.totalorder %s31, 2
      %s33 = scalar_select %p32, 0, %s31
      %s34 = sadd.s32 1, %s25
      %s35 = scalar_select %p32, %s34, %s25
      %p36 = scmp.ge.s32.totalorder %s35, 2
      %s37 = scalar_select %p36, 0, %s35
      %s38 = ssub.s32 %s25, %s37
      %s39 = ssub.s32 %s26, %s33
      %s40 = sor.u32 %s38, %s39
      %p41 = scmp.eq.s32.totalorder %s40, 0
      %s43 = sadd.s32 %s42, 1
      %s44 = scalar_select %p41, %s42, %s43
      %p47 = pneg %p41
      %p48 = scmp.eq.s32.totalorder %s18, 3
      %p49 = por %p47, %p48
      %p50 = scmp.ne.s32.totalorder %s42, %s45
      %p51 = scmp.eq.s32.totalorder %s18, 0
      %p52 = por %p50, %p51
      %p53 = scmp.ne.s32.totalorder %s42, %s45
      %p54 = scmp.eq.s32.totalorder %s23, 3
      %p55 = por %p53, %p54
      %p56 = scmp.ne.s32.totalorder %s45, %s46
      %p57 = scmp.eq.s32.totalorder %s23, 0
      %p58 = por %p56, %p57
      %p59 = scmp.ne.s32.totalorder %s45, %s46
      %p60 = scmp.eq.s32.totalorder %s24, 3
      %p61 = por %p59, %p60
      %p63 = scmp.ne.s32.totalorder %s46, %s62
      %p64 = scmp.eq.s32.totalorder %s24, 0
      %p65 = por %p63, %p64
      %s67 = sadd.s32 %s66, 1
      %p70 = scmp.eq.s32.totalorder %s18, 3
      %p71 = scmp.ne.s32.totalorder %s66, %s68
      %p72 = scmp.eq.s32.totalorder %s18, 0
      %p73 = por %p71, %p72
      %p74 = scmp.ne.s32.totalorder %s66, %s68
      %p75 = scmp.eq.s32.totalorder %s23, 3
      %p76 = por %p74, %p75
      %p77 = scmp.ne.s32.totalorder %s68, %s69
      %p78 = scmp.eq.s32.totalorder %s23, 0
      %p79 = por %p77, %p78
      %p80 = scmp.ne.s32.totalorder %s68, %s69
      %p81 = scmp.eq.s32.totalorder %s24, 3
      %p82 = por %p80, %p81
      %p84 = scmp.ne.s32.totalorder %s69, %s83
      %p85 = scmp.eq.s32.totalorder %s24, 0
      %p86 = por %p84, %p85
      %s88 = sadd.s32 %s87, 1
      %p91 = scmp.eq.s32.totalorder %s18, 3
      %p92 = scmp.ne.s32.totalorder %s87, %s89
      %p93 = scmp.eq.s32.totalorder %s18, 0
      %p94 = por %p92, %p93
      %p95 = scmp.ne.s32.totalorder %s87, %s89
      %p96 = scmp.eq.s32.totalorder %s23, 3
      %p97 = por %p95, %p96
      %p98 = scmp.ne.s32.totalorder %s89, %s90
      %p99 = scmp.eq.s32.totalorder %s23, 0
      %p100 = por %p98, %p99
      %p101 = scmp.ne.s32.totalorder %s89, %s90
      %p102 = scmp.eq.s32.totalorder %s24, 3
      %p103 = por %p101, %p102
      %p105 = scmp.ne.s32.totalorder %s90, %s104
      %p106 = scmp.eq.s32.totalorder %s24, 0
      %p107 = por %p105, %p106
      %s109 = sadd.s32 %s108, 1
      %p112 = scmp.eq.s32.totalorder %s18, 3
      %p113 = scmp.ne.s32.totalorder %s108, %s110
      %p114 = scmp.eq.s32.totalorder %s18, 0
      %p115 = por %p113, %p114
      %p116 = scmp.ne.s32.totalorder %s108, %s110
      %p117 = scmp.eq.s32.totalorder %s23, 3
      %p118 = por %p116, %p117
      %p119 = scmp.ne.s32.totalorder %s110, %s111
      %p120 = scmp.eq.s32.totalorder %s23, 0
      %p121 = por %p119, %p120
      %p122 = scmp.ne.s32.totalorder %s110, %s111
      %p123 = scmp.eq.s32.totalorder %s24, 3
      %p124 = por %p122, %p123
      %p126 = scmp.ne.s32.totalorder %s111, %s125
      %p127 = scmp.eq.s32.totalorder %s24, 0
      %p128 = por %p126, %p127
      %s130 = sadd.s32 %s129, 1
      %p133 = scmp.eq.s32.totalorder %s18, 3
      %p134 = scmp.ne.s32.totalorder %s129, %s131
      %p135 = scmp.eq.s32.totalorder %s18, 0
      %p136 = por %p134, %p135
      %p137 = scmp.ne.s32.totalorder %s129, %s131
      %p138 = scmp.eq.s32.totalorder %s23, 3
      %p139 = por %p137, %p138
      %p140 = scmp.ne.s32.totalorder %s131, %s132
      %p141 = scmp.eq.s32.totalorder %s23, 0
      %p142 = por %p140, %p141
      %p143 = scmp.ne.s32.totalorder %s131, %s132
      %p144 = scmp.eq.s32.totalorder %s24, 3
      %p145 = por %p143, %p144
      %p147 = scmp.ne.s32.totalorder %s132, %s146
      %p148 = scmp.eq.s32.totalorder %s24, 0
      %p149 = por %p147, %p148
      %s150 = ssub.s32 %s25, %s37
      %s151 = ssub.s32 %s26, %s33
      %s152 = sor.u32 %s150, %s151
      %p153 = scmp.eq.s32.totalorder %s152, 0
      %s155 = sadd.s32 %s154, 1
      %s156 = scalar_select %p153, %s154, %s155
      %p159 = pneg %p153
      %p160 = scmp.eq.s32.totalorder %s18, 3
      %p161 = por %p159, %p160
      %p162 = scmp.ne.s32.totalorder %s154, %s157
      %p163 = scmp.eq.s32.totalorder %s18, 0
      %p164 = por %p162, %p163
      %p165 = scmp.ne.s32.totalorder %s154, %s157
      %p166 = scmp.eq.s32.totalorder %s23, 3
      %p167 = por %p165, %p166
      %p168 = scmp.ne.s32.totalorder %s157, %s158
      %p169 = scmp.eq.s32.totalorder %s23, 0
      %p170 = por %p168, %p169
      %p171 = scmp.ne.s32.totalorder %s157, %s158
      %p172 = scmp.eq.s32.totalorder %s24, 3
      %p173 = por %p171, %p172
      %p175 = scmp.ne.s32.totalorder %s158, %s174
      %p176 = scmp.eq.s32.totalorder %s24, 0
      %p177 = por %p175, %p176
      %s178 = ssub.s32 %s25, %s37
      %s179 = ssub.s32 %s26, %s33
      %s180 = sor.u32 %s178, %s179
      %p181 = scmp.eq.s32.totalorder %s180, 0
      %s183 = sadd.s32 %s182, 1
      %s184 = scalar_select %p181, %s182, %s183
      %p187 = pneg %p181
      %p188 = scmp.eq.s32.totalorder %s18, 3
      %p189 = por %p187, %p188
      %p190 = scmp.ne.s32.totalorder %s182, %s185
      %p191 = scmp.eq.s32.totalorder %s18, 0
      %p192 = por %p190, %p191
      %p193 = scmp.ne.s32.totalorder %s182, %s185
      %p194 = scmp.eq.s32.totalorder %s23, 3
      %p195 = por %p193, %p194
      %p196 = scmp.ne.s32.totalorder %s185, %s186
      %p197 = scmp.eq.s32.totalorder %s23, 0
      %p198 = por %p196, %p197
      %p199 = scmp.ne.s32.totalorder %s185, %s186
      %p200 = scmp.eq.s32.totalorder %s24, 3
      %p201 = por %p199, %p200
      %p203 = scmp.ne.s32.totalorder %s186, %s202
      %p204 = scmp.eq.s32.totalorder %s24, 0
      %p205 = por %p203, %p204
      %s206 = ssub.s32 %s25, %s37
      %s207 = ssub.s32 %s26, %s33
      %s208 = sor.u32 %s206, %s207
      %p209 = scmp.eq.s32.totalorder %s208, 0
      %s211 = sadd.s32 %s210, 1
      %s212 = scalar_select %p209, %s210, %s211
      %p215 = pneg %p209
      %p216 = scmp.eq.s32.totalorder %s18, 3
      %p217 = por %p215, %p216
      %p218 = scmp.ne.s32.totalorder %s210, %s213
      %p219 = scmp.eq.s32.totalorder %s18, 0
      %p220 = por %p218, %p219
      %p221 = scmp.ne.s32.totalorder %s210, %s213
      %p222 = scmp.eq.s32.totalorder %s23, 3
      %p223 = por %p221, %p222
      %p224 = scmp.ne.s32.totalorder %s213, %s214
      %p225 = scmp.eq.s32.totalorder %s23, 0
      %p226 = por %p224, %p225
      %p227 = scmp.ne.s32.totalorder %s213, %s214
      %p228 = scmp.eq.s32.totalorder %s24, 3
      %p229 = por %p227, %p228
      %p231 = scmp.ne.s32.totalorder %s214, %s230
      %p232 = scmp.eq.s32.totalorder %s24, 0
      %p233 = por %p231, %p232
      %p234 = scmp.le.s32.totalorder 1, %s18
      %p235 = scmp.lt.s32.totalorder %s18, 5
      %p236 = pnand %p234, %p235
      %p237 = pneg %p236
      // Predicated region
      $region9: #{tpu_custom_call.1} parent=5 // pred_check
        _
      $region10: #{tpu_custom_call.1} parent=5 // pred_check_branch
        %239 = sbr.rel (%p236) target = $region12
      $region11: #{tpu_custom_call.1} parent=5 // pred_region
        %s240 = ssub.s32 %s18, 1
        // Predicated region
        $region13: #{tpu_custom_call.1} parent=11 // pred_check
          %p241 = pneg %p79
        $region14: #{tpu_custom_call.1} parent=11 // pred_check_branch
          %243 = sbr.rel (%p241) target = $region16
        $region15: #{tpu_custom_call.1} parent=11 // pred_region
          %245 = vsyncadd [#allocation5], 0
          %s247 = sshll.u32 %s1, 4
          %s248 = int_to_ptr.hbm [resolvable:$true] %s247
          %s249 = sshll.u32 [#allocation4], 4
          %s250 = int_to_ptr.vmem [resolvable:$true] %s249
          %252 = dma.hbm_to_vmem [thread:$0]  %s248, 16, %s250, [#allocation5]
        $region16: #{tpu_custom_call.1} parent=11 // pred_fallthru
          _
        // Predicated region
        $region17: #{tpu_custom_call.1} parent=11 // pred_check
          %p253 = pneg %p100
        $region18: #{tpu_custom_call.1} parent=11 // pred_check_branch
          %255 = sbr.rel (%p253) target = $region20
        $region19: #{tpu_custom_call.1} parent=11 // pred_region
          _
        $region20: #{tpu_custom_call.1} parent=11 // pred_fallthru
          _
        // Predicated region
        $region21: #{tpu_custom_call.1} parent=11 // pred_check
          %p256 = pneg %p121
        $region22: #{tpu_custom_call.1} parent=11 // pred_check_branch
          %258 = sbr.rel (%p256) target = $region24
        $region23: #{tpu_custom_call.1} parent=11 // pred_region
          %260 = vsyncadd [#allocation5], 0
          %s261 = sshll.u32 %s3, 4
          %s262 = int_to_ptr.hbm [resolvable:$true] %s261
          %s263 = sshll.u32 [#allocation6], 4
          %s264 = int_to_ptr.vmem [resolvable:$true] %s263
          %269 = dma.hbm_to_vmem [thread:$0]  %s262, 1024, %s264, [#allocation5], 128, 128, 8
        $region24: #{tpu_custom_call.1} parent=11 // pred_fallthru
          _
        // Predicated region
        $region25: #{tpu_custom_call.1} parent=11 // pred_check
          %p270 = pneg %p142
        $region26: #{tpu_custom_call.1} parent=11 // pred_check_branch
          %272 = sbr.rel (%p270) target = $region28
        $region27: #{tpu_custom_call.1} parent=11 // pred_region
          _
        $region28: #{tpu_custom_call.1} parent=11 // pred_fallthru
          _
      $region12: #{tpu_custom_call.1} parent=5 // pred_fallthru
        _
      %p273 = scmp.lt.s32.totalorder %s18, 4
      // Predicated region
      $region29: #{tpu_custom_call.1} parent=5 // pred_check
        %p274 = pneg %p273
      $region30: #{tpu_custom_call.1} parent=5 // pred_check_branch
        %276 = sbr.rel (%p274) target = $region32
      $region31: #{tpu_custom_call.1} parent=5 // pred_region
        // Predicated region
        $region33: #{tpu_custom_call.1} parent=31 // pred_check
          %p277 = pneg %p52
        $region34: #{tpu_custom_call.1} parent=31 // pred_check_branch
          %279 = sbr.rel (%p277) target = $region36
        $region35: #{tpu_custom_call.1} parent=31 // pred_region
          %s280 = sand.u32 %s42, 1
          %s281 = scalar_lea.sflag [#allocation3], %s280
          %s282 = sand.u32 %s42, 1
          %s283 = smul.addr %s282, 16
          %s284 = scalar_lea.vmem [#allocation2], %s283
          %s285 = smul.u32 2, %s26
          %287 = vsyncadd %s281, 0
          %s288 = smul.addr %s25, 4
          %s289 = sadd.s32 %s285, %s288
          %s290 = smul.addr %s289, 8
          %s291 = scalar_lea.hbm %s0, %s290
          %s292 = sshll.u32 %s291, 4
          %s293 = int_to_ptr.hbm [resolvable:$true] %s292
          %s294 = sshll.u32 %s284, 4
          %s295 = int_to_ptr.vmem [resolvable:$true] %s294
          %300 = dma.hbm_to_vmem [thread:$0]  %s293, 256, %s295, %s281, 128, 128, 8
        $region36: #{tpu_custom_call.1} parent=31 // pred_fallthru
          _
      $region32: #{tpu_custom_call.1} parent=5 // pred_fallthru
        _
      %p301 = scmp.le.s32.totalorder 1, %s18
      %p302 = scmp.lt.s32.totalorder %s18, 5
      %p303 = pnand %p301, %p302
      %p304 = pneg %p303
      // Predicated region
      $region37: #{tpu_custom_call.1} parent=5 // pred_check
        _
      $region38: #{tpu_custom_call.1} parent=5 // pred_check_branch
        %306 = sbr.rel (%p303) target = $region40
      $region39: #{tpu_custom_call.1} parent=5 // pred_region
        %s307 = ssub.s32 %s18, 1
        %s308 = sand.u32 %s45, 1
        %s309 = scalar_lea.sflag [#allocation3], %s308
        %s310 = sand.u32 %s45, 1
        %s311 = smul.addr %s310, 16
        %s312 = scalar_lea.vmem [#allocation2], %s311
        // Predicated region
        $region41: #{tpu_custom_call.1} parent=39 // pred_check
          %p313 = pneg %p58
        $region42: #{tpu_custom_call.1} parent=39 // pred_check_branch
          %315 = sbr.rel (%p313) target = $region44
        $region43: #{tpu_custom_call.1} parent=39 // pred_region
          %317 = dma.done %s309, 256
        $region44: #{tpu_custom_call.1} parent=39 // pred_fallthru
          _
        // Predicated region
        $region45: #{tpu_custom_call.1} parent=39 // pred_check
          %p318 = pneg %p79
        $region46: #{tpu_custom_call.1} parent=39 // pred_check_branch
          %320 = sbr.rel (%p318) target = $region48
        $region47: #{tpu_custom_call.1} parent=39 // pred_region
          %322 = dma.done [#allocation5], 16
        $region48: #{tpu_custom_call.1} parent=39 // pred_fallthru
          _
        // Predicated region
        $region49: #{tpu_custom_call.1} parent=39 // pred_check
          %p323 = pneg %p121
        $region50: #{tpu_custom_call.1} parent=39 // pred_check_branch
          %325 = sbr.rel (%p323) target = $region52
        $region51: #{tpu_custom_call.1} parent=39 // pred_region
          %327 = dma.done [#allocation5], 1024
        $region52: #{tpu_custom_call.1} parent=39 // pred_fallthru
          _
        %s328 = sand.u32 %s45, 1
        %s329 = scalar_lea.sflag [#allocation3], %s328
        %s330 = sand.u32 %s45, 1
        %s331 = smul.addr %s330, 16
        %s332 = scalar_lea.vmem [#allocation2], %s331
        %p333 = pneg %p58
        %p334 = pneg %p55
        %p335 = pneg %p79
        %p336 = pneg %p76
        %p337 = pneg %p100
        %p338 = pneg %p97
        %p339 = pneg %p121
        %p340 = pneg %p118
        %p341 = pneg %p142
        %p342 = pneg %p139
        %p343 = pneg %p170
        %p344 = pneg %p167
        %s345 = sand.u32 %s157, 1
        %s346 = sand.u32 %s157, 1
        %s347 = smul.addr %s346, 32
        %s348 = scalar_lea.vmem [#allocation7], %s347
        %p349 = pneg %p198
        %p350 = pneg %p195
        %s351 = sand.u32 %s185, 1
        %s352 = sand.u32 %s185, 1
        %s353 = smul.addr %s352, 32
        %s354 = scalar_lea.vmem [#allocation8], %s353
        %p355 = pneg %p226
        %p356 = pneg %p223
        %s357 = sand.u32 %s213, 1
        %s358 = sand.u32 %s213, 1
        %s359 = smul.addr %s358, 32
        %s360 = scalar_lea.vmem [#allocation9], %s359
        %s361 = smul.u32 2, %s28
        %s362 = smul.u32 2, %s28
        %s363 = smul.u32 2, %s28
        %s364 = smul.u32 2, %s28
        %v366 = vld [vmem:[%s312] sm:$0xff]
        %v367 = vld [vmem:[%s312 + $0x8] sm:$0xff]
        %v368 = vld [vmem:[#allocation4] sm:$0x1]
        %v369 = vld [vmem:[%s2] sm:$0x1]
        %vm370 = vcmask 523264
        %v371 = vsel %vm370, %v366, 0.0
        %372 = vadd.xlane.f32.xlu0 %v371
        %v373 = vpop.xlane.xlu0 %372
        %v374 = vsel %vm370, %v367, 0.0
        %375 = vadd.xlane.f32.xlu0 %v374
        %v376 = vpop.xlane.xlu0 %375
        %v377 = vrcp.pop 64.0
        %v378 = vmul.f32 64.0, %v377
        %v379 = vsub.f32 1.0, %v378
        %v380 = vmul.f32 %v377, %v379
        %v381 = vadd.f32 %v377, %v380
        %vm382 = vweird.f32 %v377
        %v383 = vsel %vm382, %v377, %v381
        %v384 = vmul.f32 %v373, %v383
        %v385 = vmul.f32 %v376, %v383
        %v386 = vsub.f32 %v366, %v384
        %v387 = vsub.f32 %v367, %v385
        %v388 = vmul.f32 %v386, %v386
        %v389 = vmul.f32 %v387, %v387
        %v390 = vsel %vm370, %v388, 0.0
        %391 = vadd.xlane.f32.xlu0 %v390
        %v392 = vpop.xlane.xlu0 %391
        %v393 = vsel %vm370, %v389, 0.0
        %394 = vadd.xlane.f32.xlu0 %v393
        %v395 = vpop.xlane.xlu0 %394
        %v396 = vmul.f32 %v392, %v383
        %v397 = vmul.f32 %v395, %v383
        %v398 = vadd.f32 %v396, 1e-05
        %v399 = vadd.f32 %v397, 1e-05
        %v400 = vrsqrt.pop %v398
        %v401 = vmul.f32 %v400, %v398
        %v402 = vmul.f32 %v401, %v400
        %v403 = vmul.f32 0.5, %v402
        %v404 = vsub.f32 1.5, %v403
        %v405 = vmul.f32 %v400, %v404
        %vm406 = vweird.f32 %v398
        %vm407 = vweird.f32 %v400
        %vm408 = vmor %vm406, %vm407
        %v409 = vsel %vm408, %v400, %v405
        %v410 = vrsqrt.pop %v399
        %v411 = vmul.f32 %v410, %v399
        %v412 = vmul.f32 %v411, %v410
        %v413 = vmul.f32 0.5, %v412
        %v414 = vsub.f32 1.5, %v413
        %v415 = vmul.f32 %v410, %v414
        %vm416 = vweird.f32 %v399
        %vm417 = vweird.f32 %v410
        %vm418 = vmor %vm416, %vm417
        %v419 = vsel %vm418, %v410, %v415
        %v420 = vmul.f32 %v386, %v409
        %v421 = vmul.f32 %v387, %v419
        %v423 = vperm.slane %v368, 0
        %v425 = vmul.f32 %v420, %v423
        %v426 = vmul.f32 %v421, %v423
        %v428 = vperm.slane %v369, 0
        %v430 = vadd.f32 %v425, %v428
        %v431 = vadd.f32 %v426, %v428
        %v432 = vpack.c.bf16 %v431, %v430
        %v433 = vld [vmem:[#allocation6] sm:$0xff]
        %v434 = vld [vmem:[#allocation6 + $0x8] sm:$0xff]
        %v435 = vld [vmem:[#allocation6 + $0x10] sm:$0xff]
        %v436 = vld [vmem:[#allocation6 + $0x18] sm:$0xff]
        %v437 = vld [vmem:[#allocation6 + $0x20] sm:$0xff]
        %v438 = vld [vmem:[#allocation6 + $0x28] sm:$0xff]
        %v439 = vld [vmem:[#allocation6 + $0x30] sm:$0xff]
        %v440 = vld [vmem:[#allocation6 + $0x38] sm:$0xff]
        %v441 = vld [vmem:[%s4] sm:$0x3]
        %v443 = vperm.slane %v441, 0
        %v444 = vperm.slane %v441, 1
        %v455 = vunpack.c.l.b16 %v433
        %v456 = vunpack.c.h.b16 %v433
        %v457 = vunpack.c.l.b16 %v434
        %v458 = vunpack.c.h.b16 %v434
        %v459 = vunpack.c.l.b16 %v435
        %v460 = vunpack.c.h.b16 %v435
        %v461 = vunpack.c.l.b16 %v436
        %v462 = vunpack.c.h.b16 %v436
        %v463 = vunpack.c.l.b16 %v437
        %v464 = vunpack.c.h.b16 %v437
        %v465 = vunpack.c.l.b16 %v438
        %v466 = vunpack.c.h.b16 %v438
        %v467 = vunpack.c.l.b16 %v439
        %v468 = vunpack.c.h.b16 %v439
        %v469 = vunpack.c.l.b16 %v440
        %v470 = vunpack.c.h.b16 %v440
        %v471 = vpack.c.b16 %v457, %v455
        %v472 = vpack.c.b16 %v458, %v456
        %v473 = vpack.c.b16 %v461, %v459
        %v474 = vpack.c.b16 %v462, %v460
        %v475 = vpack.c.b16 %v465, %v463
        %v476 = vpack.c.b16 %v466, %v464
        %v477 = vpack.c.b16 %v469, %v467
        %v478 = vpack.c.b16 %v470, %v468
        %v488 = vsel %vm370, %v432, 0
        %490 = vmatpush.bf16.msra.mxu0 0
        %491 = vmatpush.bf16.msra.mxu0 0
        %492 = vmatpush.bf16.msra.mxu0 0
        %493 = vmatpush.bf16.msra.mxu0 0
        %494 = vmatpush.bf16.msra.mxu0 %v477
        %495 = vmatpush.bf16.msra.mxu0 %v475
        %496 = vmatpush.bf16.msra.mxu0 %v473
        %497 = vmatpush.bf16.msra.mxu0 %v471
        %498 = vmatmul.bf16.gmra.mxu0 %v488
        %v499 = vpop.f32.mrf.mxu0
        %v500 = vadd.f32 %v443, %v499
        %v501 = vpop.f32.mrf.mxu0
        %v502 = vadd.f32 %v443, %v501
        %503 = vdwg.mxu0
        %504 = vmatpush.bf16.msra.mxu0 0
        %505 = vmatpush.bf16.msra.mxu0 0
        %506 = vmatpush.bf16.msra.mxu0 0
        %507 = vmatpush.bf16.msra.mxu0 0
        %508 = vmatpush.bf16.msra.mxu0 %v478
        %509 = vmatpush.bf16.msra.mxu0 %v476
        %510 = vmatpush.bf16.msra.mxu0 %v474
        %511 = vmatpush.bf16.msra.mxu0 %v472
        %512 = vmatmul.bf16.gmra.mxu0 %v488
        %v513 = vpop.f32.mrf.mxu0
        %v514 = vadd.f32 %v444, %v513
        %v515 = vpop.f32.mrf.mxu0
        %v516 = vadd.f32 %v444, %v515
        %517 = vdwg.mxu0
        %v518 = vmul.f32 %v500, 0.25
        %v519 = vmul.f32 %v502, 0.25
        %v520 = vpack.c.bf16 %v518, %v518
        %v521 = vpack.c.bf16 %v519, %v519
        %vm522 = vcmask 125952
        %523 = vst.msk [vmem:[%s348] sm:$0xf] %vm522, %v520
        %524 = vst.msk [vmem:[%s348 + $0x4] sm:$0xf] %vm522, %v521
        %v525 = vpack.c.bf16 %v500, %v500
        %v526 = vpack.c.bf16 %v502, %v502
        %529 = vrot.lane.b32.xlu0 %v525, 64
        %v530 = vpop.permute.xlu0 %529
        %531 = vrot.lane.b32.xlu0 %v526, 64
        %v532 = vpop.permute.xlu0 %531
        %535 = vst.msk [vmem:[%s354] sm:$0xf] %vm522, %v530
        %536 = vst.msk [vmem:[%s354 + $0x4] sm:$0xf] %vm522, %v532
        %v537 = vpack.c.bf16 %v514, %v514
        %v538 = vpack.c.bf16 %v516, %v516
        %539 = vst.msk [vmem:[%s360] sm:$0xf] %vm522, %v537
        %540 = vst.msk [vmem:[%s360 + $0x4] sm:$0xf] %vm522, %v538
        %543 = vrot.lane.b32.xlu0 %v520, 112
        %v544 = vpop.permute.xlu0 %543
        %545 = vrot.lane.b32.xlu0 %v521, 112
        %v546 = vpop.permute.xlu0 %545
        %s549 = scalar_lea.vmem %s348, 8 [#allocation7]
        %550 = vst.msk [vmem:[%s549] sm:$0xf] %vm522, %v544
        %551 = vst.msk [vmem:[%s549 + $0x4] sm:$0xf] %vm522, %v546
        %552 = vrot.lane.b32.xlu0 %v525, 48
        %v553 = vpop.permute.xlu0 %552
        %554 = vrot.lane.b32.xlu0 %v526, 48
        %v555 = vpop.permute.xlu0 %554
        %s558 = scalar_lea.vmem %s354, 8 [#allocation8]
        %559 = vst.msk [vmem:[%s558] sm:$0xf] %vm522, %v553
        %560 = vst.msk [vmem:[%s558 + $0x4] sm:$0xf] %vm522, %v555
        %563 = vrot.lane.b32.xlu0 %v537, 112
        %v564 = vpop.permute.xlu0 %563
        %565 = vrot.lane.b32.xlu0 %v538, 112
        %v566 = vpop.permute.xlu0 %565
        %s569 = scalar_lea.vmem %s360, 8 [#allocation9]
        %570 = vst.msk [vmem:[%s569] sm:$0xf] %vm522, %v564
        %571 = vst.msk [vmem:[%s569 + $0x4] sm:$0xf] %vm522, %v566
        %572 = vrot.lane.b32.xlu0 %v520, 96
        %v573 = vpop.permute.xlu0 %572
        %574 = vrot.lane.b32.xlu0 %v521, 96
        %v575 = vpop.permute.xlu0 %574
        %s578 = scalar_lea.vmem %s348, 16 [#allocation7]
        %579 = vst.msk [vmem:[%s578] sm:$0xf] %vm522, %v573
        %580 = vst.msk [vmem:[%s578 + $0x4] sm:$0xf] %vm522, %v575
        %581 = vrot.lane.b32.xlu0 %v525, 32
        %v582 = vpop.permute.xlu0 %581
        %583 = vrot.lane.b32.xlu0 %v526, 32
        %v584 = vpop.permute.xlu0 %583
        %s587 = scalar_lea.vmem %s354, 16 [#allocation8]
        %588 = vst.msk [vmem:[%s587] sm:$0xf] %vm522, %v582
        %589 = vst.msk [vmem:[%s587 + $0x4] sm:$0xf] %vm522, %v584
        %590 = vrot.lane.b32.xlu0 %v537, 96
        %v591 = vpop.permute.xlu0 %590
        %592 = vrot.lane.b32.xlu0 %v538, 96
        %v593 = vpop.permute.xlu0 %592
        %s596 = scalar_lea.vmem %s360, 16 [#allocation9]
        %597 = vst.msk [vmem:[%s596] sm:$0xf] %vm522, %v591
        %598 = vst.msk [vmem:[%s596 + $0x4] sm:$0xf] %vm522, %v593
        %599 = vrot.lane.b32.xlu0 %v520, 80
        %v600 = vpop.permute.xlu0 %599
        %601 = vrot.lane.b32.xlu0 %v521, 80
        %v602 = vpop.permute.xlu0 %601
        %s605 = scalar_lea.vmem %s348, 24 [#allocation7]
        %606 = vst.msk [vmem:[%s605] sm:$0xf] %vm522, %v600
        %607 = vst.msk [vmem:[%s605 + $0x4] sm:$0xf] %vm522, %v602
        %608 = vrot.lane.b32.xlu0 %v525, 16
        %v609 = vpop.permute.xlu0 %608
        %610 = vrot.lane.b32.xlu0 %v526, 16
        %v611 = vpop.permute.xlu0 %610
        %s614 = scalar_lea.vmem %s354, 24 [#allocation8]
        %615 = vst.msk [vmem:[%s614] sm:$0xf] %vm522, %v609
        %616 = vst.msk [vmem:[%s614 + $0x4] sm:$0xf] %vm522, %v611
        %617 = vrot.lane.b32.xlu0 %v537, 80
        %v618 = vpop.permute.xlu0 %617
        %619 = vrot.lane.b32.xlu0 %v538, 80
        %v620 = vpop.permute.xlu0 %619
        %s623 = scalar_lea.vmem %s360, 24 [#allocation9]
        %624 = vst.msk [vmem:[%s623] sm:$0xf] %vm522, %v618
        %625 = vst.msk [vmem:[%s623 + $0x4] sm:$0xf] %vm522, %v620
        %s626 = sand.u32 %s157, 1
        %s627 = sand.u32 %s157, 1
        %s628 = smul.addr %s627, 32
        %s629 = scalar_lea.vmem [#allocation7], %s628
        %s630 = sand.u32 %s185, 1
        %s631 = sand.u32 %s185, 1
        %s632 = smul.addr %s631, 32
        %s633 = scalar_lea.vmem [#allocation8], %s632
        %s634 = sand.u32 %s213, 1
        %s635 = sand.u32 %s213, 1
        %s636 = smul.addr %s635, 32
        %s637 = scalar_lea.vmem [#allocation9], %s636
        // Predicated region
        $region53: #{tpu_custom_call.1} parent=39 // pred_check
          %p638 = pneg %p167
        $region54: #{tpu_custom_call.1} parent=39 // pred_check_branch
          %640 = sbr.rel (%p638) target = $region56
        $region55: #{tpu_custom_call.1} parent=39 // pred_region
          %s641 = smul.u32 2, %s28
          %s642 = smul.addr %s27, 16
          %s643 = sadd.s32 %s641, %s642
          %s644 = smul.addr %s643, 4
          %s645 = scalar_lea.vmem %s5, %s644
          // Predicated region
          $region57: #{tpu_custom_call.1} parent=55 // pred_check
            _
          $region58: #{tpu_custom_call.1} parent=55 // pred_check_branch
            %647 = sbr.rel (0) target = $region60
          $region59: #{tpu_custom_call.1} parent=55 // pred_region
            // Predicated region
            $region61: #{tpu_custom_call.1} parent=59 // pred_check
              _
            $region62: #{tpu_custom_call.1} parent=59 // pred_check_branch
              %649 = sbr.rel target = $region64
            $region63: #{tpu_custom_call.1} parent=59 // pred_region
              // Predicated region
              $region76: #{tpu_custom_call.1} parent=63 // pred_check
                _
              $region77: #{tpu_custom_call.1} parent=63 // pred_check_branch
                %679 = sbr.rel (0) target = $region79
              $region78: #{tpu_custom_call.1} parent=63 // pred_region
                loop: start=0, step=1, limit=1
                $region80: #{tpu_custom_call.1} parent=78 // loop_pre_header
                  _
                $region81: #{tpu_custom_call.1} parent=78 // loop_header
                  %s681 = sphi 0, %s685
                  %p682 = scmp.ge.s32.totalorder %s681, 1
                  %s686 = sphi %s629, %s629
                  %s687 = sphi %s645, %s645
                $region82: #{tpu_custom_call.1} parent=78 // loop_header_branch
                  %684 = sbr.rel (%p682) target = $region86
                $region83: #{tpu_custom_call.1} parent=78 // loop_body
                  _
                $region84: #{tpu_custom_call.1} parent=78 // loop_footer
                  %s685 = sadd.s32 1, %s681
                $region85: #{tpu_custom_call.1} parent=78 // loop_footer_branch
                  %680 = sbr.rel target = $region81
                $region86: #{tpu_custom_call.1} parent=78 // loop_exit
                  _
                %s689 = ssub.s32 16, 1
                loop: start=0, step=1, limit=1
                $region87: #{tpu_custom_call.1} parent=78 // loop_pre_header
                  _
                $region88: #{tpu_custom_call.1} parent=78 // loop_header
                  %s691 = sphi 0, %s695
                  %p692 = scmp.ge.s32.totalorder %s691, 1
                  %s696 = sphi %s629, %s629
                  %s697 = sphi %s645, %s645
                $region89: #{tpu_custom_call.1} parent=78 // loop_header_branch
                  %694 = sbr.rel (%p692) target = $region93
                $region90: #{tpu_custom_call.1} parent=78 // loop_body
                  %v698 = vld [vmem:[%s696] sm:%s689]
                  %699 = vst [vmem:[%s697] sm:%s689] %v698
                  %v700 = vld [vmem:[%s696 + $0x4] sm:%s689]
                  %701 = vst [vmem:[%s697 + $0x4] sm:%s689] %v700
                  %v702 = vld [vmem:[%s696 + $0x8] sm:%s689]
                  %703 = vst [vmem:[%s697 + $0x10] sm:%s689] %v702
                  %v704 = vld [vmem:[%s696 + $0xc] sm:%s689]
                  %705 = vst [vmem:[%s697 + $0x14] sm:%s689] %v704
                  %v706 = vld [vmem:[%s696 + $0x10] sm:%s689]
                  %707 = vst [vmem:[%s697 + $0x20] sm:%s689] %v706
                  %v708 = vld [vmem:[%s696 + $0x14] sm:%s689]
                  %709 = vst [vmem:[%s697 + $0x24] sm:%s689] %v708
                  %v710 = vld [vmem:[%s696 + $0x18] sm:%s689]
                  %711 = vst [vmem:[%s697 + $0x30] sm:%s689] %v710
                  %v712 = vld [vmem:[%s696 + $0x1c] sm:%s689]
                  %713 = vst [vmem:[%s697 + $0x34] sm:%s689] %v712
                $region91: #{tpu_custom_call.1} parent=78 // loop_footer
                  %s695 = sadd.s32 1, %s691
                $region92: #{tpu_custom_call.1} parent=78 // loop_footer_branch
                  %690 = sbr.rel target = $region88
                $region93: #{tpu_custom_call.1} parent=78 // loop_exit
                  _
              $region79: #{tpu_custom_call.1} parent=63 // pred_fallthru
                _
            $region64: #{tpu_custom_call.1} parent=59 // pred_fallthru
              _
            // Predicated region
            $region65: #{tpu_custom_call.1} parent=59 // pred_check
              _
            $region66: #{tpu_custom_call.1} parent=59 // pred_check_branch
              %651 = sbr.rel (0) target = $region68
            $region67: #{tpu_custom_call.1} parent=59 // pred_region
              %s653 = ssub.s32 16, 1
              loop: start=0, step=1, limit=1
              $region69: #{tpu_custom_call.1} parent=67 // loop_pre_header
                _
              $region70: #{tpu_custom_call.1} parent=67 // loop_header
                %s655 = sphi 0, %s659
                %p656 = scmp.ge.s32.totalorder %s655, 1
                %s660 = sphi %s629, %s629
                %s661 = sphi %s645, %s645
              $region71: #{tpu_custom_call.1} parent=67 // loop_header_branch
                %658 = sbr.rel (%p656) target = $region75
              $region72: #{tpu_custom_call.1} parent=67 // loop_body
                %v662 = vld [vmem:[%s660] sm:%s653]
                %663 = vst [vmem:[%s661] sm:%s653] %v662
                %v664 = vld [vmem:[%s660 + $0x4] sm:%s653]
                %665 = vst [vmem:[%s661 + $0x4] sm:%s653] %v664
                %v666 = vld [vmem:[%s660 + $0x8] sm:%s653]
                %667 = vst [vmem:[%s661 + $0x10] sm:%s653] %v666
                %v668 = vld [vmem:[%s660 + $0xc] sm:%s653]
                %669 = vst [vmem:[%s661 + $0x14] sm:%s653] %v668
                %v670 = vld [vmem:[%s660 + $0x10] sm:%s653]
                %671 = vst [vmem:[%s661 + $0x20] sm:%s653] %v670
                %v672 = vld [vmem:[%s660 + $0x14] sm:%s653]
                %673 = vst [vmem:[%s661 + $0x24] sm:%s653] %v672
                %v674 = vld [vmem:[%s660 + $0x18] sm:%s653]
                %675 = vst [vmem:[%s661 + $0x30] sm:%s653] %v674
                %v676 = vld [vmem:[%s660 + $0x1c] sm:%s653]
                %677 = vst [vmem:[%s661 + $0x34] sm:%s653] %v676
              $region73: #{tpu_custom_call.1} parent=67 // loop_footer
                %s659 = sadd.s32 1, %s655
              $region74: #{tpu_custom_call.1} parent=67 // loop_footer_branch
                %654 = sbr.rel target = $region70
              $region75: #{tpu_custom_call.1} parent=67 // loop_exit
                _
            $region68: #{tpu_custom_call.1} parent=59 // pred_fallthru
              _
          $region60: #{tpu_custom_call.1} parent=55 // pred_fallthru
            _
          %714 = vnop
        $region56: #{tpu_custom_call.1} parent=39 // pred_fallthru
          _
        // Predicated region
        $region94: #{tpu_custom_call.1} parent=39 // pred_check
          %p715 = pneg %p195
        $region95: #{tpu_custom_call.1} parent=39 // pred_check_branch
          %717 = sbr.rel (%p715) target = $region97
        $region96: #{tpu_custom_call.1} parent=39 // pred_region
          %s718 = smul.u32 2, %s28
          %s719 = smul.addr %s27, 16
          %s720 = sadd.s32 %s718, %s719
          %s721 = smul.addr %s720, 4
          %s722 = scalar_lea.vmem %s6, %s721
          // Predicated region
          $region98: #{tpu_custom_call.1} parent=96 // pred_check
            _
          $region99: #{tpu_custom_call.1} parent=96 // pred_check_branch
            %724 = sbr.rel (0) target = $region101
          $region100: #{tpu_custom_call.1} parent=96 // pred_region
            // Predicated region
            $region102: #{tpu_custom_call.1} parent=100 // pred_check
              _
            $region103: #{tpu_custom_call.1} parent=100 // pred_check_branch
              %726 = sbr.rel target = $region105
            $region104: #{tpu_custom_call.1} parent=100 // pred_region
              // Predicated region
              $region117: #{tpu_custom_call.1} parent=104 // pred_check
                _
              $region118: #{tpu_custom_call.1} parent=104 // pred_check_branch
                %756 = sbr.rel (0) target = $region120
              $region119: #{tpu_custom_call.1} parent=104 // pred_region
                loop: start=0, step=1, limit=1
                $region121: #{tpu_custom_call.1} parent=119 // loop_pre_header
                  _
                $region122: #{tpu_custom_call.1} parent=119 // loop_header
                  %s758 = sphi 0, %s762
                  %p759 = scmp.ge.s32.totalorder %s758, 1
                  %s763 = sphi %s633, %s633
                  %s764 = sphi %s722, %s722
                $region123: #{tpu_custom_call.1} parent=119 // loop_header_branch
                  %761 = sbr.rel (%p759) target = $region127
                $region124: #{tpu_custom_call.1} parent=119 // loop_body
                  _
                $region125: #{tpu_custom_call.1} parent=119 // loop_footer
                  %s762 = sadd.s32 1, %s758
                $region126: #{tpu_custom_call.1} parent=119 // loop_footer_branch
                  %757 = sbr.rel target = $region122
                $region127: #{tpu_custom_call.1} parent=119 // loop_exit
                  _
                %s766 = ssub.s32 16, 1
                loop: start=0, step=1, limit=1
                $region128: #{tpu_custom_call.1} parent=119 // loop_pre_header
                  _
                $region129: #{tpu_custom_call.1} parent=119 // loop_header
                  %s768 = sphi 0, %s772
                  %p769 = scmp.ge.s32.totalorder %s768, 1
                  %s773 = sphi %s633, %s633
                  %s774 = sphi %s722, %s722
                $region130: #{tpu_custom_call.1} parent=119 // loop_header_branch
                  %771 = sbr.rel (%p769) target = $region134
                $region131: #{tpu_custom_call.1} parent=119 // loop_body
                  %v775 = vld [vmem:[%s773] sm:%s766]
                  %776 = vst [vmem:[%s774] sm:%s766] %v775
                  %v777 = vld [vmem:[%s773 + $0x4] sm:%s766]
                  %778 = vst [vmem:[%s774 + $0x4] sm:%s766] %v777
                  %v779 = vld [vmem:[%s773 + $0x8] sm:%s766]
                  %780 = vst [vmem:[%s774 + $0x10] sm:%s766] %v779
                  %v781 = vld [vmem:[%s773 + $0xc] sm:%s766]
                  %782 = vst [vmem:[%s774 + $0x14] sm:%s766] %v781
                  %v783 = vld [vmem:[%s773 + $0x10] sm:%s766]
                  %784 = vst [vmem:[%s774 + $0x20] sm:%s766] %v783
                  %v785 = vld [vmem:[%s773 + $0x14] sm:%s766]
                  %786 = vst [vmem:[%s774 + $0x24] sm:%s766] %v785
                  %v787 = vld [vmem:[%s773 + $0x18] sm:%s766]
                  %788 = vst [vmem:[%s774 + $0x30] sm:%s766] %v787
                  %v789 = vld [vmem:[%s773 + $0x1c] sm:%s766]
                  %790 = vst [vmem:[%s774 + $0x34] sm:%s766] %v789
                $region132: #{tpu_custom_call.1} parent=119 // loop_footer
                  %s772 = sadd.s32 1, %s768
                $region133: #{tpu_custom_call.1} parent=119 // loop_footer_branch
                  %767 = sbr.rel target = $region129
                $region134: #{tpu_custom_call.1} parent=119 // loop_exit
                  _
              $region120: #{tpu_custom_call.1} parent=104 // pred_fallthru
                _
            $region105: #{tpu_custom_call.1} parent=100 // pred_fallthru
              _
            // Predicated region
            $region106: #{tpu_custom_call.1} parent=100 // pred_check
              _
            $region107: #{tpu_custom_call.1} parent=100 // pred_check_branch
              %728 = sbr.rel (0) target = $region109
            $region108: #{tpu_custom_call.1} parent=100 // pred_region
              %s730 = ssub.s32 16, 1
              loop: start=0, step=1, limit=1
              $region110: #{tpu_custom_call.1} parent=108 // loop_pre_header
                _
              $region111: #{tpu_custom_call.1} parent=108 // loop_header
                %s732 = sphi 0, %s736
                %p733 = scmp.ge.s32.totalorder %s732, 1
                %s737 = sphi %s633, %s633
                %s738 = sphi %s722, %s722
              $region112: #{tpu_custom_call.1} parent=108 // loop_header_branch
                %735 = sbr.rel (%p733) target = $region116
              $region113: #{tpu_custom_call.1} parent=108 // loop_body
                %v739 = vld [vmem:[%s737] sm:%s730]
                %740 = vst [vmem:[%s738] sm:%s730] %v739
                %v741 = vld [vmem:[%s737 + $0x4] sm:%s730]
                %742 = vst [vmem:[%s738 + $0x4] sm:%s730] %v741
                %v743 = vld [vmem:[%s737 + $0x8] sm:%s730]
                %744 = vst [vmem:[%s738 + $0x10] sm:%s730] %v743
                %v745 = vld [vmem:[%s737 + $0xc] sm:%s730]
                %746 = vst [vmem:[%s738 + $0x14] sm:%s730] %v745
                %v747 = vld [vmem:[%s737 + $0x10] sm:%s730]
                %748 = vst [vmem:[%s738 + $0x20] sm:%s730] %v747
                %v749 = vld [vmem:[%s737 + $0x14] sm:%s730]
                %750 = vst [vmem:[%s738 + $0x24] sm:%s730] %v749
                %v751 = vld [vmem:[%s737 + $0x18] sm:%s730]
                %752 = vst [vmem:[%s738 + $0x30] sm:%s730] %v751
                %v753 = vld [vmem:[%s737 + $0x1c] sm:%s730]
                %754 = vst [vmem:[%s738 + $0x34] sm:%s730] %v753
              $region114: #{tpu_custom_call.1} parent=108 // loop_footer
                %s736 = sadd.s32 1, %s732
              $region115: #{tpu_custom_call.1} parent=108 // loop_footer_branch
                %731 = sbr.rel target = $region111
              $region116: #{tpu_custom_call.1} parent=108 // loop_exit
                _
            $region109: #{tpu_custom_call.1} parent=100 // pred_fallthru
              _
          $region101: #{tpu_custom_call.1} parent=96 // pred_fallthru
            _
          %791 = vnop
        $region97: #{tpu_custom_call.1} parent=39 // pred_fallthru
          _
        // Predicated region
        $region135: #{tpu_custom_call.1} parent=39 // pred_check
          %p792 = pneg %p223
        $region136: #{tpu_custom_call.1} parent=39 // pred_check_branch
          %794 = sbr.rel (%p792) target = $region138
        $region137: #{tpu_custom_call.1} parent=39 // pred_region
          %s795 = smul.u32 2, %s28
          %s796 = smul.addr %s27, 16
          %s797 = sadd.s32 %s795, %s796
          %s798 = smul.addr %s797, 4
          %s799 = scalar_lea.vmem %s7, %s798
          // Predicated region
          $region139: #{tpu_custom_call.1} parent=137 // pred_check
            _
          $region140: #{tpu_custom_call.1} parent=137 // pred_check_branch
            %801 = sbr.rel (0) target = $region142
          $region141: #{tpu_custom_call.1} parent=137 // pred_region
            // Predicated region
            $region143: #{tpu_custom_call.1} parent=141 // pred_check
              _
            $region144: #{tpu_custom_call.1} parent=141 // pred_check_branch
              %803 = sbr.rel target = $region146
            $region145: #{tpu_custom_call.1} parent=141 // pred_region
              // Predicated region
              $region158: #{tpu_custom_call.1} parent=145 // pred_check
                _
              $region159: #{tpu_custom_call.1} parent=145 // pred_check_branch
                %833 = sbr.rel (0) target = $region161
              $region160: #{tpu_custom_call.1} parent=145 // pred_region
                loop: start=0, step=1, limit=1
                $region162: #{tpu_custom_call.1} parent=160 // loop_pre_header
                  _
                $region163: #{tpu_custom_call.1} parent=160 // loop_header
                  %s835 = sphi 0, %s839
                  %p836 = scmp.ge.s32.totalorder %s835, 1
                  %s840 = sphi %s637, %s637
                  %s841 = sphi %s799, %s799
                $region164: #{tpu_custom_call.1} parent=160 // loop_header_branch
                  %838 = sbr.rel (%p836) target = $region168
                $region165: #{tpu_custom_call.1} parent=160 // loop_body
                  _
                $region166: #{tpu_custom_call.1} parent=160 // loop_footer
                  %s839 = sadd.s32 1, %s835
                $region167: #{tpu_custom_call.1} parent=160 // loop_footer_branch
                  %834 = sbr.rel target = $region163
                $region168: #{tpu_custom_call.1} parent=160 // loop_exit
                  _
                %s843 = ssub.s32 16, 1
                loop: start=0, step=1, limit=1
                $region169: #{tpu_custom_call.1} parent=160 // loop_pre_header
                  _
                $region170: #{tpu_custom_call.1} parent=160 // loop_header
                  %s845 = sphi 0, %s849
                  %p846 = scmp.ge.s32.totalorder %s845, 1
                  %s850 = sphi %s637, %s637
                  %s851 = sphi %s799, %s799
                $region171: #{tpu_custom_call.1} parent=160 // loop_header_branch
                  %848 = sbr.rel (%p846) target = $region175
                $region172: #{tpu_custom_call.1} parent=160 // loop_body
                  %v852 = vld [vmem:[%s850] sm:%s843]
                  %853 = vst [vmem:[%s851] sm:%s843] %v852
                  %v854 = vld [vmem:[%s850 + $0x4] sm:%s843]
                  %855 = vst [vmem:[%s851 + $0x4] sm:%s843] %v854
                  %v856 = vld [vmem:[%s850 + $0x8] sm:%s843]
                  %857 = vst [vmem:[%s851 + $0x10] sm:%s843] %v856
                  %v858 = vld [vmem:[%s850 + $0xc] sm:%s843]
                  %859 = vst [vmem:[%s851 + $0x14] sm:%s843] %v858
                  %v860 = vld [vmem:[%s850 + $0x10] sm:%s843]
                  %861 = vst [vmem:[%s851 + $0x20] sm:%s843] %v860
                  %v862 = vld [vmem:[%s850 + $0x14] sm:%s843]
                  %863 = vst [vmem:[%s851 + $0x24] sm:%s843] %v862
                  %v864 = vld [vmem:[%s850 + $0x18] sm:%s843]
                  %865 = vst [vmem:[%s851 + $0x30] sm:%s843] %v864
                  %v866 = vld [vmem:[%s850 + $0x1c] sm:%s843]
                  %867 = vst [vmem:[%s851 + $0x34] sm:%s843] %v866
                $region173: #{tpu_custom_call.1} parent=160 // loop_footer
                  %s849 = sadd.s32 1, %s845
                $region174: #{tpu_custom_call.1} parent=160 // loop_footer_branch
                  %844 = sbr.rel target = $region170
                $region175: #{tpu_custom_call.1} parent=160 // loop_exit
                  _
              $region161: #{tpu_custom_call.1} parent=145 // pred_fallthru
                _
            $region146: #{tpu_custom_call.1} parent=141 // pred_fallthru
              _
            // Predicated region
            $region147: #{tpu_custom_call.1} parent=141 // pred_check
              _
            $region148: #{tpu_custom_call.1} parent=141 // pred_check_branch
              %805 = sbr.rel (0) target = $region150
            $region149: #{tpu_custom_call.1} parent=141 // pred_region
              %s807 = ssub.s32 16, 1
              loop: start=0, step=1, limit=1
              $region151: #{tpu_custom_call.1} parent=149 // loop_pre_header
                _
              $region152: #{tpu_custom_call.1} parent=149 // loop_header
                %s809 = sphi 0, %s813
                %p810 = scmp.ge.s32.totalorder %s809, 1
                %s814 = sphi %s637, %s637
                %s815 = sphi %s799, %s799
              $region153: #{tpu_custom_call.1} parent=149 // loop_header_branch
                %812 = sbr.rel (%p810) target = $region157
              $region154: #{tpu_custom_call.1} parent=149 // loop_body
                %v816 = vld [vmem:[%s814] sm:%s807]
                %817 = vst [vmem:[%s815] sm:%s807] %v816
                %v818 = vld [vmem:[%s814 + $0x4] sm:%s807]
                %819 = vst [vmem:[%s815 + $0x4] sm:%s807] %v818
                %v820 = vld [vmem:[%s814 + $0x8] sm:%s807]
                %821 = vst [vmem:[%s815 + $0x10] sm:%s807] %v820
                %v822 = vld [vmem:[%s814 + $0xc] sm:%s807]
                %823 = vst [vmem:[%s815 + $0x14] sm:%s807] %v822
                %v824 = vld [vmem:[%s814 + $0x10] sm:%s807]
                %825 = vst [vmem:[%s815 + $0x20] sm:%s807] %v824
                %v826 = vld [vmem:[%s814 + $0x14] sm:%s807]
                %827 = vst [vmem:[%s815 + $0x24] sm:%s807] %v826
                %v828 = vld [vmem:[%s814 + $0x18] sm:%s807]
                %829 = vst [vmem:[%s815 + $0x30] sm:%s807] %v828
                %v830 = vld [vmem:[%s814 + $0x1c] sm:%s807]
                %831 = vst [vmem:[%s815 + $0x34] sm:%s807] %v830
              $region155: #{tpu_custom_call.1} parent=149 // loop_footer
                %s813 = sadd.s32 1, %s809
              $region156: #{tpu_custom_call.1} parent=149 // loop_footer_branch
                %808 = sbr.rel target = $region152
              $region157: #{tpu_custom_call.1} parent=149 // loop_exit
                _
            $region150: #{tpu_custom_call.1} parent=141 // pred_fallthru
              _
          $region142: #{tpu_custom_call.1} parent=137 // pred_fallthru
            _
          %868 = vnop
        $region138: #{tpu_custom_call.1} parent=39 // pred_fallthru
          _
      $region40: #{tpu_custom_call.1} parent=5 // pred_fallthru
        _
      %p869 = scmp.le.s32.totalorder 2, %s18
      // Predicated region
      $region176: #{tpu_custom_call.1} parent=5 // pred_check
        %p870 = pneg %p869
      $region177: #{tpu_custom_call.1} parent=5 // pred_check_branch
        %872 = sbr.rel (%p870) target = $region179
      $region178: #{tpu_custom_call.1} parent=5 // pred_region
        %s873 = ssub.s32 %s18, 2
        // Predicated region
        $region180: #{tpu_custom_call.1} parent=178 // pred_check
          %p874 = pneg %p173
        $region181: #{tpu_custom_call.1} parent=178 // pred_check_branch
          %876 = sbr.rel (%p874) target = $region183
        $region182: #{tpu_custom_call.1} parent=178 // pred_region
          %s877 = sand.u32 %s158, 1
          %s878 = sand.u32 %s158, 1
          %s879 = smul.addr %s878, 32
          %s880 = scalar_lea.vmem [#allocation7], %s879
        $region183: #{tpu_custom_call.1} parent=178 // pred_fallthru
          _
        // Predicated region
        $region184: #{tpu_custom_call.1} parent=178 // pred_check
          %p881 = pneg %p201
        $region185: #{tpu_custom_call.1} parent=178 // pred_check_branch
          %883 = sbr.rel (%p881) target = $region187
        $region186: #{tpu_custom_call.1} parent=178 // pred_region
          %s884 = sand.u32 %s186, 1
          %s885 = sand.u32 %s186, 1
          %s886 = smul.addr %s885, 32
          %s887 = scalar_lea.vmem [#allocation8], %s886
        $region187: #{tpu_custom_call.1} parent=178 // pred_fallthru
          _
        // Predicated region
        $region188: #{tpu_custom_call.1} parent=178 // pred_check
          %p888 = pneg %p229
        $region189: #{tpu_custom_call.1} parent=178 // pred_check_branch
          %890 = sbr.rel (%p888) target = $region191
        $region190: #{tpu_custom_call.1} parent=178 // pred_region
          %s891 = sand.u32 %s214, 1
          %s892 = sand.u32 %s214, 1
          %s893 = smul.addr %s892, 32
          %s894 = scalar_lea.vmem [#allocation9], %s893
        $region191: #{tpu_custom_call.1} parent=178 // pred_fallthru
          _
      $region179: #{tpu_custom_call.1} parent=5 // pred_fallthru
        _
    $region6: #{tpu_custom_call.1} parent=1 // loop_footer
      %s22 = sadd.s32 1, %s18
    $region7: #{tpu_custom_call.1} parent=1 // loop_footer_branch
      %17 = sbr.rel target = $region3
    $region8: #{tpu_custom_call.1} parent=1 // loop_exit
      _
    %895 = vsyncpa [#allocation3], 1
    %s896 = scalar_lea.sflag [#allocation3], 1
    %897 = vsyncpa %s896, 1
    %898 = vsyncpa [#allocation5], 1

</llo_original>
